<compile_context>
chip_gen: v7x
topology: tpu7x:2x2x1
jax: 0.10.0
libtpu: 0.0.40
codegen_flags: <defaults>
</compile_context>

<pallas_src>
import math

import numpy as np
import jax
import jax.numpy as jnp
from jax import lax
from jax.experimental import pallas as pl
from jax.experimental.pallas import tpu as pltpu


def _round_up(x, m):
    return ((x + m - 1) // m) * m


def _cdiv(a, b):
    return -(-a // b)


def _init_linear_params(key, fan_in, fan_out, compute_dtype):
    """nn.Linear-style init; weight stored transposed as (fan_in, fan_out)."""
    kw, kb = jax.random.split(key)
    bound = 1.0 / math.sqrt(fan_in)
    w = jax.random.uniform(kw, (fan_in, fan_out), jnp.float32, -bound, bound)
    b = jax.random.uniform(kb, (fan_out,), jnp.float32, -bound, bound)
    return w.astype(compute_dtype), b


def _block_diag(w, n):
    """(a, b) -> (n*a, n*b) block-diagonal embedding (per-modality linear
    applied to the flattened [mod, feature] layout)."""
    a, b = w.shape
    out = jnp.zeros((n * a, n * b), w.dtype)
    for m in range(n):
        out = out.at[m * a:(m + 1) * a, m * b:(m + 1) * b].set(w)
    return out


# ----------------------------------------------------------------------------
# Fused forward kernel
# ----------------------------------------------------------------------------

def _make_caunet3_kernel(n_mod, z_dim, num_heads, compute_dtype):
    S, Z, H = n_mod, z_dim, num_heads
    hd = Z // H
    D = S * Z                       # flattened per-sample width
    SH = S * H
    scale = 1.0 / math.sqrt(hd)
    f32 = jnp.float32

    def kernel(x_ref, wi_ref, bi_ref, wqkv_ref, bqkv_ref, wo_ref, bo_ref,
               wl_ref, bl_ref, rep_ref, pool_ref, expand_ref, mask_ref,
               o_ref):
        xb = x_ref[...].astype(compute_dtype)

        # --- init_lin: (tm, D) @ (D, D), f32 accumulate + f32 bias ----------
        h = jnp.dot(xb, wi_ref[...], preferred_element_type=f32) + bi_ref[...]

        # --- qkv projection for all modalities at once (block-diag GEMM);
        #     columns ordered [Q | K | V], each with lanes = [mod, head, hd].
        qkv = jnp.dot(h.astype(compute_dtype), wqkv_ref[...],
                      preferred_element_type=f32) + bqkv_ref[...]
        q = qkv[:, :D]
        k = qkv[:, D:2 * D]
        v = qkv[:, 2 * D:]

        rep = rep_ref[...]          # (Z, D)  replicate one modality over all
        pool = pool_ref[...]        # (D, SH) sum the hd lanes of each (mod,h)
        expand = expand_ref[...]    # (SH, D) broadcast (mod,h) back over hd
        mask = mask_ref[...]        # (S, SH) mask[j, (i,h)] = mask_ij

        # --- attention logits, one key modality j at a time -----------------
        logits = []
        for j in range(S):
            k_rep = jnp.dot(k[:, j * Z:(j + 1) * Z], rep,
                            preferred_element_type=f32)          # (tm, D)
            lj = jnp.dot(q * k_rep, pool,
                         preferred_element_type=f32) * scale     # (tm, SH)
            lj = jnp.where(mask[j:j + 1, :] == 0.0, -9e15, lj)
            logits.append(lj)

        # --- numerically stable softmax over the S static key modalities ----
        m = logits[0]
        for j in range(1, S):
            m = jnp.maximum(m, logits[j])
        es = [jnp.exp(lj - m) for lj in logits]
        denom = es[0]
        for j in range(1, S):
            denom = denom + es[j]
        inv_denom = 1.0 / denom

        # --- weighted sum of values ------------------------------------------
        vals = None
        for j in range(S):
            a_exp = jnp.dot(es[j] * inv_denom, expand,
                            preferred_element_type=f32)          # (tm, D)
            v_rep = jnp.dot(v[:, j * Z:(j + 1) * Z], rep,
                            preferred_element_type=f32)
            contrib = a_exp * v_rep
            vals = contrib if vals is None else vals + contrib

        # --- o_proj (block-diag) + residual + lin2conv (block-diag) ----------
        o = jnp.dot(vals.astype(compute_dtype), wo_ref[...],
                    preferred_element_type=f32) + bo_ref[...]
        r = h + o
        out = jnp.dot(r.astype(compute_dtype), wl_ref[...],
                      preferred_element_type=f32) + bl_ref[...]
        o_ref[...] = out.astype(o_ref.dtype)

    return kernel


# ----------------------------------------------------------------------------
# Module
# ----------------------------------------------------------------------------

class CAUNET3Pallas:
    """Cross-attention front-end of the PyTorch CAUNET3 module:
    init_lin -> residual cross-attention (off-diagonal mask) -> lin2conv,
    fused into a single Pallas TPU kernel tiled over the batch."""
    # TODO(synk): the convolutional UNet backbone of CAUNET3 (Conv2d /
    # GroupNorm / LinearAttention / up-down-sampling / time MLP) is not
    # translated to Pallas in this file.

    def __init__(self, n_mod, z_dim, dim, dim2, key, cross=True, num_heads=4,
                 compute_dtype=jnp.bfloat16, tm_max=512):
        assert z_dim == dim * dim2, "lin2conv view requires z_dim == dim*dim2"
        assert z_dim % num_heads == 0
        self.n_mod, self.z_dim = n_mod, z_dim
        self.dim, self.dim2 = dim, dim2
        self.cross = cross
        self.num_heads = num_heads
        self.head_dim = z_dim // num_heads
        self.compute_dtype = compute_dtype
        self.tm_max = _round_up(tm_max, 8)
        self.D = n_mod * z_dim

        k_init, k_qkv, k_o, k_l2c = jax.random.split(key, 4)
        E = z_dim
        # Source-of-truth parameters (same layer shapes as the PyTorch module;
        # qkv output columns ordered [q|k|v][head][dim]).
        self.init_w, self.init_b = _init_linear_params(
            k_init, self.D, self.D, compute_dtype)
        self.qkv_w, self.qkv_b = _init_linear_params(
            k_qkv, z_dim, 3 * E, compute_dtype)
        self.o_w, self.o_b = _init_linear_params(k_o, E, E, compute_dtype)
        self.l2c_w, self.l2c_b = _init_linear_params(
            k_l2c, z_dim, z_dim, compute_dtype)

        if cross:
            mask_np = (np.ones((n_mod, n_mod), np.float32)
                       - np.eye(n_mod, dtype=np.float32))
            self.mask = jnp.asarray(mask_np)
        else:
            mask_np = np.ones((n_mod, n_mod), np.float32)
            self.mask = None

        self._build_fused_operands(mask_np)
        self._kernel = _make_caunet3_kernel(n_mod, z_dim, num_heads,
                                            compute_dtype)

    def _build_fused_operands(self, mask_np):
        S, Z, H = self.n_mod, self.z_dim, self.num_heads
        hd, E, D, SH = self.head_dim, self.z_dim, self.D, self.n_mod * self.num_heads

        wq, wk, wv = self.qkv_w[:, :E], self.qkv_w[:, E:2 * E], self.qkv_w[:, 2 * E:]
        bq, bk, bv = self.qkv_b[:E], self.qkv_b[E:2 * E], self.qkv_b[2 * E:]

        # Per-modality linears embedded as block-diagonal GEMMs.
        self.wqkv_bd = jnp.concatenate(
            [_block_diag(wq, S), _block_diag(wk, S), _block_diag(wv, S)], axis=1)
        self.bqkv_bd = jnp.concatenate(
            [jnp.tile(bq, S), jnp.tile(bk, S), jnp.tile(bv, S)]).reshape(1, 3 * D)
        self.wo_bd = _block_diag(self.o_w, S)
        self.bo_bd = jnp.tile(self.o_b, S).reshape(1, D)
        self.wl_bd = _block_diag(self.l2c_w, S)
        self.bl_bd = jnp.tile(self.l2c_b, S).reshape(1, D)
        self.init_b2d = self.init_b.reshape(1, D)

        # Constant matrices for the in-kernel attention (all tiny, f32).
        rep = np.tile(np.eye(Z, dtype=np.float32), (1, S))               # (Z, D)
        lane = np.arange(D)
        pool = (lane[:, None] // hd == np.arange(SH)[None, :]).astype(np.float32)
        self.rep = jnp.asarray(rep)
        self.pool = jnp.asarray(pool)              # (D, SH)
        self.expand = jnp.asarray(pool.T)          # (SH, D)
        # mask_vals[j, i*H + h] = mask[i, j]
        mv = np.repeat(mask_np.T[:, :, None], H, axis=2).reshape(S, SH)
        self.mask_vals = jnp.asarray(mv)

        # The fused kernel keeps every weight VMEM-resident.
        weight_bytes = (self.init_w.size + self.wqkv_bd.size + self.wo_bd.size
                        + self.wl_bd.size) * np.dtype(self.compute_dtype).itemsize
        assert weight_bytes < 8 * 1024 * 1024, (
            "fused CAUNET3 kernel expects n_mod*z_dim small enough that the "
            "block-diagonal weights stay VMEM-resident")

    # --------------------------------------------------------------------
    def __call__(self, x):
        # x: (B, n_mod, z_dim) -> (B, n_mod, dim, dim2)
        B = x.shape[0]
        out2d = self._fused_forward(x.reshape(B, self.D))
        return out2d.reshape(B, self.n_mod, self.dim, self.dim2)

    def _fused_forward(self, x2d):
        M, D = x2d.shape
        assert D == self.D
        S, H = self.n_mod, self.num_heads
        SH = S * H

        # Batch tiling: pad to a sublane multiple, keep >=2 tiles when the
        # batch allows (megacore / v7x dual-TC), cap tiles at tm_max rows.
        M8 = _round_up(max(M, 1), 8)
        grid_m = max(1, _cdiv(M8, self.tm_max))
        if grid_m == 1 and M8 > 256:
            grid_m = 2
        tm = _round_up(_cdiv(M8, grid_m), 8)
        M_pad = tm * grid_m
        if M_pad != M:
            x2d = jnp.pad(x2d, ((0, M_pad - M), (0, 0)))

        def tiled(i):
            return (i, 0)

        def fixed(i):
            return (0, 0)

        in_specs = [
            pl.BlockSpec((tm, D), tiled),            # x
            pl.BlockSpec((D, D), fixed),             # init_lin weight
            pl.BlockSpec((1, D), fixed),             # init_lin bias
            pl.BlockSpec((D, 3 * D), fixed),         # qkv block-diag weight
            pl.BlockSpec((1, 3 * D), fixed),         # qkv bias
            pl.BlockSpec((D, D), fixed),             # o_proj block-diag weight
            pl.BlockSpec((1, D), fixed),             # o_proj bias
            pl.BlockSpec((D, D), fixed),             # lin2conv block-diag weight
            pl.BlockSpec((1, D), fixed),             # lin2conv bias
            pl.BlockSpec((self.z_dim, D), fixed),    # modality replication matrix
            pl.BlockSpec((D, SH), fixed),            # head-dim pooling matrix
            pl.BlockSpec((SH, D), fixed),            # head-dim expansion matrix
            pl.BlockSpec((S, SH), fixed),            # attention mask values
        ]
        out_spec = pl.BlockSpec((tm, D), tiled)

        flops = (12 * M_pad * D * D
                 + 2 * M_pad * S * (2 * self.z_dim * D + 2 * D * SH))
        weight_bytes = int((self.init_w.size + self.wqkv_bd.size
                            + self.wo_bd.size + self.wl_bd.size) * 2)
        const_bytes = int((self.rep.size + self.pool.size + self.expand.size
                           + self.mask_vals.size + 6 * D) * 4)
        cost = pl.CostEstimate(
            flops=int(flops),
            transcendentals=int(M_pad * S * SH),
            bytes_accessed=int(M_pad * D * 4 * 2) + weight_bytes + const_bytes)

        out = pl.pallas_call(
            self._kernel,
            out_shape=jax.ShapeDtypeStruct((M_pad, D), jnp.float32),
            grid_spec=pltpu.PrefetchScalarGridSpec(
                num_scalar_prefetch=0,
                grid=(grid_m,),
                in_specs=in_specs,
                out_specs=out_spec,
            ),
            compiler_params=pltpu.CompilerParams(
                dimension_semantics=("parallel",),
                vmem_limit_bytes=32 * 1024 * 1024,
            ),
            cost_estimate=cost,
        )(x2d, self.init_w, self.init_b2d, self.wqkv_bd, self.bqkv_bd,
          self.wo_bd, self.bo_bd, self.wl_bd, self.bl_bd,
          self.rep, self.pool, self.expand, self.mask_vals)

        return out[:M] if M_pad != M else out


# ----------------------------------------------------------------------------
# Plain-JAX reference (same parameters, textbook formulation, XLA dots)
# ----------------------------------------------------------------------------

def _caunet3_ref(model, x):
    B = x.shape[0]
    S, Z = model.n_mod, model.z_dim
    H, hd = model.num_heads, model.head_dim
    E = Z
    f32 = jnp.float32
    hi = lax.Precision.HIGHEST

    h = jnp.dot(x.reshape(B, S * Z).astype(model.init_w.dtype), model.init_w,
                preferred_element_type=f32) + model.init_b
    hs = h.reshape(B * S, Z)
    qkv = jnp.dot(hs.astype(model.qkv_w.dtype), model.qkv_w,
                  preferred_element_type=f32) + model.qkv_b
    q = qkv[:, :E].reshape(B, S, H, hd)
    k = qkv[:, E:2 * E].reshape(B, S, H, hd)
    v = qkv[:, 2 * E:].reshape(B, S, H, hd)
    logits = jnp.einsum("bihd,bjhd->bhij", q, k, precision=hi) / math.sqrt(hd)
    if model.mask is not None:
        logits = jnp.where(model.mask == 0, -9e15, logits)
    attn = jax.nn.softmax(logits, axis=-1)
    vals = jnp.einsum("bhij,bjhd->bihd", attn, v, precision=hi).reshape(B * S, E)
    o = jnp.dot(vals.astype(model.o_w.dtype), model.o_w,
                preferred_element_type=f32) + model.o_b
    r = hs + o
    out = jnp.dot(r.astype(model.l2c_w.dtype), model.l2c_w,
                  preferred_element_type=f32) + model.l2c_b
    return out.reshape(B, S, model.dim, model.dim2)


# ----------------------------------------------------------------------------

if __name__ == "__main__":
    B, n_mod, z_dim = 2, 4, 32
    dim, dim2 = 8, 4                      # z_dim == dim * dim2

    key = jax.random.PRNGKey(0)
    kx, kp = jax.random.split(key)
    x = jax.random.normal(kx, (B, n_mod, z_dim), jnp.float32)

    model = CAUNET3Pallas(n_mod=n_mod, z_dim=z_dim, dim=dim, dim2=dim2, key=kp)

    out = jax.jit(model.__call__)(x)
    jax.block_until_ready(out)

    ref = _caunet3_ref(model, x)
    assert out.shape == (B, n_mod, dim, dim2)
    max_err = float(jnp.max(jnp.abs(out - ref)))
    assert jnp.allclose(out, ref, atol=1e-3, rtol=1e-3), f"max_err={max_err}"

    print("KERNEL_OK")
</pallas_src>

<mosaic_0001>
module attributes {stable_mosaic.version = 11 : i64} {
  func.func @kernel(%arg0: i32, %arg1: memref<8x128xf32, #tpu.memory_space<vmem>>, %arg2: memref<128x128xbf16, #tpu.memory_space<vmem>>, %arg3: memref<1x128xf32, #tpu.memory_space<vmem>>, %arg4: memref<128x384xbf16, #tpu.memory_space<vmem>>, %arg5: memref<1x384xf32, #tpu.memory_space<vmem>>, %arg6: memref<128x128xbf16, #tpu.memory_space<vmem>>, %arg7: memref<1x128xf32, #tpu.memory_space<vmem>>, %arg8: memref<128x128xbf16, #tpu.memory_space<vmem>>, %arg9: memref<1x128xf32, #tpu.memory_space<vmem>>, %arg10: memref<32x128xf32, #tpu.memory_space<vmem>>, %arg11: memref<128x16xf32, #tpu.memory_space<vmem>>, %arg12: memref<16x128xf32, #tpu.memory_space<vmem>>, %arg13: memref<4x16xf32, #tpu.memory_space<vmem>>, %arg14: memref<8x128xf32, #tpu.memory_space<vmem>>) attributes {dimension_semantics = [#tpu.dimension_semantics<parallel>], iteration_bounds = array<i64: 1>, scalar_prefetch = 0 : i64, scratch_operands = 0 : i64, tpu.core_type = #tpu.core_type<tc>, window_params = [{transform_indices = @transform_0, window_bounds = array<i64: 8, 128>}, {pipeline_mode = #tpu.pipeline_mode<synchronous>, transform_indices = @transform_1, window_bounds = array<i64: 128, 128>}, {pipeline_mode = #tpu.pipeline_mode<synchronous>, transform_indices = @transform_2, window_bounds = array<i64: 1, 128>}, {pipeline_mode = #tpu.pipeline_mode<synchronous>, transform_indices = @transform_3, window_bounds = array<i64: 128, 384>}, {pipeline_mode = #tpu.pipeline_mode<synchronous>, transform_indices = @transform_4, window_bounds = array<i64: 1, 384>}, {pipeline_mode = #tpu.pipeline_mode<synchronous>, transform_indices = @transform_5, window_bounds = array<i64: 128, 128>}, {pipeline_mode = #tpu.pipeline_mode<synchronous>, transform_indices = @transform_6, window_bounds = array<i64: 1, 128>}, {pipeline_mode = #tpu.pipeline_mode<synchronous>, transform_indices = @transform_7, window_bounds = array<i64: 128, 128>}, {pipeline_mode = #tpu.pipeline_mode<synchronous>, transform_indices = @transform_8, window_bounds = array<i64: 1, 128>}, {pipeline_mode = #tpu.pipeline_mode<synchronous>, transform_indices = @transform_9, window_bounds = array<i64: 32, 128>}, {pipeline_mode = #tpu.pipeline_mode<synchronous>, transform_indices = @transform_10, window_bounds = array<i64: 128, 16>}, {pipeline_mode = #tpu.pipeline_mode<synchronous>, transform_indices = @transform_11, window_bounds = array<i64: 16, 128>}, {pipeline_mode = #tpu.pipeline_mode<synchronous>, transform_indices = @transform_12, window_bounds = array<i64: 4, 16>}, {transform_indices = @transform_13, window_bounds = array<i64: 8, 128>}]} {
    %c0 = arith.constant 0 : index
    %c0_0 = arith.constant 0 : index
    %0 = vector.load %arg1[%c0, %c0_0] : memref<8x128xf32, #tpu.memory_space<vmem>>, vector<8x128xf32>
    %1 = arith.truncf %0 : vector<8x128xf32> to vector<8x128xbf16>
    %c0_1 = arith.constant 0 : index
    %c0_2 = arith.constant 0 : index
    %2 = vector.load %arg2[%c0_1, %c0_2] : memref<128x128xbf16, #tpu.memory_space<vmem>>, vector<128x128xbf16>
    %cst = arith.constant dense<0.000000e+00> : vector<8x128xf32>
    %3 = tpu.matmul %1, %2, %cst {dimension_numbers = #tpu.dot_dimension_numbers<[1], [0], [0], [1], [0, 0, 1, 1], [], []>} : vector<8x128xbf16>, vector<128x128xbf16>, vector<8x128xf32> -> vector<8x128xf32>
    %c0_3 = arith.constant 0 : index
    %c0_4 = arith.constant 0 : index
    %4 = vector.load %arg3[%c0_3, %c0_4] : memref<1x128xf32, #tpu.memory_space<vmem>>, vector<1x128xf32>
    %5 = vector.broadcast %4 : vector<1x128xf32> to vector<8x128xf32>
    %6 = arith.addf %3, %5 : vector<8x128xf32>
    %7 = arith.truncf %6 : vector<8x128xf32> to vector<8x128xbf16>
    %c0_5 = arith.constant 0 : index
    %c0_6 = arith.constant 0 : index
    %8 = vector.load %arg4[%c0_5, %c0_6] : memref<128x384xbf16, #tpu.memory_space<vmem>>, vector<128x384xbf16>
    %cst_7 = arith.constant dense<0.000000e+00> : vector<8x384xf32>
    %9 = tpu.matmul %7, %8, %cst_7 {dimension_numbers = #tpu.dot_dimension_numbers<[1], [0], [0], [1], [0, 0, 1, 1], [], []>} : vector<8x128xbf16>, vector<128x384xbf16>, vector<8x384xf32> -> vector<8x384xf32>
    %c0_8 = arith.constant 0 : index
    %c0_9 = arith.constant 0 : index
    %10 = vector.load %arg5[%c0_8, %c0_9] : memref<1x384xf32, #tpu.memory_space<vmem>>, vector<1x384xf32>
    %11 = vector.broadcast %10 : vector<1x384xf32> to vector<8x384xf32>
    %12 = arith.addf %9, %11 : vector<8x384xf32>
    %13 = vector.extract_strided_slice %12 {offsets = [0, 0], sizes = [8, 128], strides = [1, 1]} : vector<8x384xf32> to vector<8x128xf32>
    %14 = vector.extract_strided_slice %12 {offsets = [0, 128], sizes = [8, 128], strides = [1, 1]} : vector<8x384xf32> to vector<8x128xf32>
    %15 = vector.extract_strided_slice %12 {offsets = [0, 256], sizes = [8, 128], strides = [1, 1]} : vector<8x384xf32> to vector<8x128xf32>
    %c0_10 = arith.constant 0 : index
    %c0_11 = arith.constant 0 : index
    %16 = vector.load %arg10[%c0_10, %c0_11] : memref<32x128xf32, #tpu.memory_space<vmem>>, vector<32x128xf32>
    %c0_12 = arith.constant 0 : index
    %c0_13 = arith.constant 0 : index
    %17 = vector.load %arg11[%c0_12, %c0_13] : memref<128x16xf32, #tpu.memory_space<vmem>>, vector<128x16xf32>
    %c0_14 = arith.constant 0 : index
    %c0_15 = arith.constant 0 : index
    %18 = vector.load %arg12[%c0_14, %c0_15] : memref<16x128xf32, #tpu.memory_space<vmem>>, vector<16x128xf32>
    %c0_16 = arith.constant 0 : index
    %c0_17 = arith.constant 0 : index
    %19 = vector.load %arg13[%c0_16, %c0_17] : memref<4x16xf32, #tpu.memory_space<vmem>>, vector<4x16xf32>
    %20 = vector.extract_strided_slice %14 {offsets = [0, 0], sizes = [8, 32], strides = [1, 1]} : vector<8x128xf32> to vector<8x32xf32>
    %cst_18 = arith.constant dense<0.000000e+00> : vector<8x128xf32>
    %21 = tpu.matmul %20, %16, %cst_18 {dimension_numbers = #tpu.dot_dimension_numbers<[1], [0], [0], [1], [0, 0, 1, 1], [], []>} : vector<8x32xf32>, vector<32x128xf32>, vector<8x128xf32> -> vector<8x128xf32>
    %22 = arith.mulf %13, %21 : vector<8x128xf32>
    %cst_19 = arith.constant dense<0.000000e+00> : vector<8x16xf32>
    %23 = tpu.matmul %22, %17, %cst_19 {dimension_numbers = #tpu.dot_dimension_numbers<[1], [0], [0], [1], [0, 0, 1, 1], [], []>} : vector<8x128xf32>, vector<128x16xf32>, vector<8x16xf32> -> vector<8x16xf32>
    %cst_20 = arith.constant 0.353553385 : f32
    %24 = vector.broadcast %cst_20 : f32 to vector<8x16xf32>
    %25 = arith.mulf %23, %24 : vector<8x16xf32>
    %26 = vector.extract_strided_slice %19 {offsets = [0, 0], sizes = [1, 16], strides = [1, 1]} : vector<4x16xf32> to vector<1x16xf32>
    %cst_21 = arith.constant 0.000000e+00 : f32
    %27 = vector.broadcast %cst_21 : f32 to vector<1x16xf32>
    %28 = arith.cmpf oeq, %26, %27 : vector<1x16xf32>
    %cst_22 = arith.constant -9.000000e+15 : f32
    %29 = vector.shape_cast %28 : vector<1x16xi1> to vector<1x16xi1>
    %30 = vector.broadcast %29 : vector<1x16xi1> to vector<8x16xi1>
    %31 = vector.broadcast %cst_22 : f32 to vector<8x16xf32>
    %32 = arith.select %30, %31, %25 : vector<8x16xi1>, vector<8x16xf32>
    %33 = vector.extract_strided_slice %14 {offsets = [0, 32], sizes = [8, 32], strides = [1, 1]} : vector<8x128xf32> to vector<8x32xf32>
    %cst_23 = arith.constant dense<0.000000e+00> : vector<8x128xf32>
    %34 = tpu.matmul %33, %16, %cst_23 {dimension_numbers = #tpu.dot_dimension_numbers<[1], [0], [0], [1], [0, 0, 1, 1], [], []>} : vector<8x32xf32>, vector<32x128xf32>, vector<8x128xf32> -> vector<8x128xf32>
    %35 = arith.mulf %13, %34 : vector<8x128xf32>
    %cst_24 = arith.constant dense<0.000000e+00> : vector<8x16xf32>
    %36 = tpu.matmul %35, %17, %cst_24 {dimension_numbers = #tpu.dot_dimension_numbers<[1], [0], [0], [1], [0, 0, 1, 1], [], []>} : vector<8x128xf32>, vector<128x16xf32>, vector<8x16xf32> -> vector<8x16xf32>
    %cst_25 = arith.constant 0.353553385 : f32
    %37 = vector.broadcast %cst_25 : f32 to vector<8x16xf32>
    %38 = arith.mulf %36, %37 : vector<8x16xf32>
    %39 = vector.extract_strided_slice %19 {offsets = [1, 0], sizes = [1, 16], strides = [1, 1]} : vector<4x16xf32> to vector<1x16xf32>
    %cst_26 = arith.constant 0.000000e+00 : f32
    %40 = vector.broadcast %cst_26 : f32 to vector<1x16xf32>
    %41 = arith.cmpf oeq, %39, %40 : vector<1x16xf32>
    %cst_27 = arith.constant -9.000000e+15 : f32
    %42 = vector.shape_cast %41 : vector<1x16xi1> to vector<1x16xi1>
    %43 = vector.broadcast %42 : vector<1x16xi1> to vector<8x16xi1>
    %44 = vector.broadcast %cst_27 : f32 to vector<8x16xf32>
    %45 = arith.select %43, %44, %38 : vector<8x16xi1>, vector<8x16xf32>
    %46 = vector.extract_strided_slice %14 {offsets = [0, 64], sizes = [8, 32], strides = [1, 1]} : vector<8x128xf32> to vector<8x32xf32>
    %cst_28 = arith.constant dense<0.000000e+00> : vector<8x128xf32>
    %47 = tpu.matmul %46, %16, %cst_28 {dimension_numbers = #tpu.dot_dimension_numbers<[1], [0], [0], [1], [0, 0, 1, 1], [], []>} : vector<8x32xf32>, vector<32x128xf32>, vector<8x128xf32> -> vector<8x128xf32>
    %48 = arith.mulf %13, %47 : vector<8x128xf32>
    %cst_29 = arith.constant dense<0.000000e+00> : vector<8x16xf32>
    %49 = tpu.matmul %48, %17, %cst_29 {dimension_numbers = #tpu.dot_dimension_numbers<[1], [0], [0], [1], [0, 0, 1, 1], [], []>} : vector<8x128xf32>, vector<128x16xf32>, vector<8x16xf32> -> vector<8x16xf32>
    %cst_30 = arith.constant 0.353553385 : f32
    %50 = vector.broadcast %cst_30 : f32 to vector<8x16xf32>
    %51 = arith.mulf %49, %50 : vector<8x16xf32>
    %52 = vector.extract_strided_slice %19 {offsets = [2, 0], sizes = [1, 16], strides = [1, 1]} : vector<4x16xf32> to vector<1x16xf32>
    %cst_31 = arith.constant 0.000000e+00 : f32
    %53 = vector.broadcast %cst_31 : f32 to vector<1x16xf32>
    %54 = arith.cmpf oeq, %52, %53 : vector<1x16xf32>
    %cst_32 = arith.constant -9.000000e+15 : f32
    %55 = vector.shape_cast %54 : vector<1x16xi1> to vector<1x16xi1>
    %56 = vector.broadcast %55 : vector<1x16xi1> to vector<8x16xi1>
    %57 = vector.broadcast %cst_32 : f32 to vector<8x16xf32>
    %58 = arith.select %56, %57, %51 : vector<8x16xi1>, vector<8x16xf32>
    %59 = vector.extract_strided_slice %14 {offsets = [0, 96], sizes = [8, 32], strides = [1, 1]} : vector<8x128xf32> to vector<8x32xf32>
    %cst_33 = arith.constant dense<0.000000e+00> : vector<8x128xf32>
    %60 = tpu.matmul %59, %16, %cst_33 {dimension_numbers = #tpu.dot_dimension_numbers<[1], [0], [0], [1], [0, 0, 1, 1], [], []>} : vector<8x32xf32>, vector<32x128xf32>, vector<8x128xf32> -> vector<8x128xf32>
    %61 = arith.mulf %13, %60 : vector<8x128xf32>
    %cst_34 = arith.constant dense<0.000000e+00> : vector<8x16xf32>
    %62 = tpu.matmul %61, %17, %cst_34 {dimension_numbers = #tpu.dot_dimension_numbers<[1], [0], [0], [1], [0, 0, 1, 1], [], []>} : vector<8x128xf32>, vector<128x16xf32>, vector<8x16xf32> -> vector<8x16xf32>
    %cst_35 = arith.constant 0.353553385 : f32
    %63 = vector.broadcast %cst_35 : f32 to vector<8x16xf32>
    %64 = arith.mulf %62, %63 : vector<8x16xf32>
    %65 = vector.extract_strided_slice %19 {offsets = [3, 0], sizes = [1, 16], strides = [1, 1]} : vector<4x16xf32> to vector<1x16xf32>
    %cst_36 = arith.constant 0.000000e+00 : f32
    %66 = vector.broadcast %cst_36 : f32 to vector<1x16xf32>
    %67 = arith.cmpf oeq, %65, %66 : vector<1x16xf32>
    %cst_37 = arith.constant -9.000000e+15 : f32
    %68 = vector.shape_cast %67 : vector<1x16xi1> to vector<1x16xi1>
    %69 = vector.broadcast %68 : vector<1x16xi1> to vector<8x16xi1>
    %70 = vector.broadcast %cst_37 : f32 to vector<8x16xf32>
    %71 = arith.select %69, %70, %64 : vector<8x16xi1>, vector<8x16xf32>
    %72 = arith.maximumf %32, %45 : vector<8x16xf32>
    %73 = arith.maximumf %72, %58 : vector<8x16xf32>
    %74 = arith.maximumf %73, %71 : vector<8x16xf32>
    %75 = arith.subf %32, %74 : vector<8x16xf32>
    %76 = math.exp %75 : vector<8x16xf32>
    %77 = arith.subf %45, %74 : vector<8x16xf32>
    %78 = math.exp %77 : vector<8x16xf32>
    %79 = arith.subf %58, %74 : vector<8x16xf32>
    %80 = math.exp %79 : vector<8x16xf32>
    %81 = arith.subf %71, %74 : vector<8x16xf32>
    %82 = math.exp %81 : vector<8x16xf32>
    %83 = arith.addf %76, %78 : vector<8x16xf32>
    %84 = arith.addf %83, %80 : vector<8x16xf32>
    %85 = arith.addf %84, %82 : vector<8x16xf32>
    %cst_38 = arith.constant 1.000000e+00 : f32
    %86 = vector.broadcast %cst_38 : f32 to vector<8x16xf32>
    %87 = arith.divf %86, %85 : vector<8x16xf32>
    %88 = arith.mulf %76, %87 : vector<8x16xf32>
    %cst_39 = arith.constant dense<0.000000e+00> : vector<8x128xf32>
    %89 = tpu.matmul %88, %18, %cst_39 {dimension_numbers = #tpu.dot_dimension_numbers<[1], [0], [0], [1], [0, 0, 1, 1], [], []>} : vector<8x16xf32>, vector<16x128xf32>, vector<8x128xf32> -> vector<8x128xf32>
    %90 = vector.extract_strided_slice %15 {offsets = [0, 0], sizes = [8, 32], strides = [1, 1]} : vector<8x128xf32> to vector<8x32xf32>
    %cst_40 = arith.constant dense<0.000000e+00> : vector<8x128xf32>
    %91 = tpu.matmul %90, %16, %cst_40 {dimension_numbers = #tpu.dot_dimension_numbers<[1], [0], [0], [1], [0, 0, 1, 1], [], []>} : vector<8x32xf32>, vector<32x128xf32>, vector<8x128xf32> -> vector<8x128xf32>
    %92 = arith.mulf %89, %91 : vector<8x128xf32>
    %93 = arith.mulf %78, %87 : vector<8x16xf32>
    %cst_41 = arith.constant dense<0.000000e+00> : vector<8x128xf32>
    %94 = tpu.matmul %93, %18, %cst_41 {dimension_numbers = #tpu.dot_dimension_numbers<[1], [0], [0], [1], [0, 0, 1, 1], [], []>} : vector<8x16xf32>, vector<16x128xf32>, vector<8x128xf32> -> vector<8x128xf32>
    %95 = vector.extract_strided_slice %15 {offsets = [0, 32], sizes = [8, 32], strides = [1, 1]} : vector<8x128xf32> to vector<8x32xf32>
    %cst_42 = arith.constant dense<0.000000e+00> : vector<8x128xf32>
    %96 = tpu.matmul %95, %16, %cst_42 {dimension_numbers = #tpu.dot_dimension_numbers<[1], [0], [0], [1], [0, 0, 1, 1], [], []>} : vector<8x32xf32>, vector<32x128xf32>, vector<8x128xf32> -> vector<8x128xf32>
    %97 = arith.mulf %94, %96 : vector<8x128xf32>
    %98 = arith.addf %92, %97 : vector<8x128xf32>
    %99 = arith.mulf %80, %87 : vector<8x16xf32>
    %cst_43 = arith.constant dense<0.000000e+00> : vector<8x128xf32>
    %100 = tpu.matmul %99, %18, %cst_43 {dimension_numbers = #tpu.dot_dimension_numbers<[1], [0], [0], [1], [0, 0, 1, 1], [], []>} : vector<8x16xf32>, vector<16x128xf32>, vector<8x128xf32> -> vector<8x128xf32>
    %101 = vector.extract_strided_slice %15 {offsets = [0, 64], sizes = [8, 32], strides = [1, 1]} : vector<8x128xf32> to vector<8x32xf32>
    %cst_44 = arith.constant dense<0.000000e+00> : vector<8x128xf32>
    %102 = tpu.matmul %101, %16, %cst_44 {dimension_numbers = #tpu.dot_dimension_numbers<[1], [0], [0], [1], [0, 0, 1, 1], [], []>} : vector<8x32xf32>, vector<32x128xf32>, vector<8x128xf32> -> vector<8x128xf32>
    %103 = arith.mulf %100, %102 : vector<8x128xf32>
    %104 = arith.addf %98, %103 : vector<8x128xf32>
    %105 = arith.mulf %82, %87 : vector<8x16xf32>
    %cst_45 = arith.constant dense<0.000000e+00> : vector<8x128xf32>
    %106 = tpu.matmul %105, %18, %cst_45 {dimension_numbers = #tpu.dot_dimension_numbers<[1], [0], [0], [1], [0, 0, 1, 1], [], []>} : vector<8x16xf32>, vector<16x128xf32>, vector<8x128xf32> -> vector<8x128xf32>
    %107 = vector.extract_strided_slice %15 {offsets = [0, 96], sizes = [8, 32], strides = [1, 1]} : vector<8x128xf32> to vector<8x32xf32>
    %cst_46 = arith.constant dense<0.000000e+00> : vector<8x128xf32>
    %108 = tpu.matmul %107, %16, %cst_46 {dimension_numbers = #tpu.dot_dimension_numbers<[1], [0], [0], [1], [0, 0, 1, 1], [], []>} : vector<8x32xf32>, vector<32x128xf32>, vector<8x128xf32> -> vector<8x128xf32>
    %109 = arith.mulf %106, %108 : vector<8x128xf32>
    %110 = arith.addf %104, %109 : vector<8x128xf32>
    %111 = arith.truncf %110 : vector<8x128xf32> to vector<8x128xbf16>
    %c0_47 = arith.constant 0 : index
    %c0_48 = arith.constant 0 : index
    %112 = vector.load %arg6[%c0_47, %c0_48] : memref<128x128xbf16, #tpu.memory_space<vmem>>, vector<128x128xbf16>
    %cst_49 = arith.constant dense<0.000000e+00> : vector<8x128xf32>
    %113 = tpu.matmul %111, %112, %cst_49 {dimension_numbers = #tpu.dot_dimension_numbers<[1], [0], [0], [1], [0, 0, 1, 1], [], []>} : vector<8x128xbf16>, vector<128x128xbf16>, vector<8x128xf32> -> vector<8x128xf32>
    %c0_50 = arith.constant 0 : index
    %c0_51 = arith.constant 0 : index
    %114 = vector.load %arg7[%c0_50, %c0_51] : memref<1x128xf32, #tpu.memory_space<vmem>>, vector<1x128xf32>
    %115 = vector.broadcast %114 : vector<1x128xf32> to vector<8x128xf32>
    %116 = arith.addf %113, %115 : vector<8x128xf32>
    %117 = arith.addf %6, %116 : vector<8x128xf32>
    %118 = arith.truncf %117 : vector<8x128xf32> to vector<8x128xbf16>
    %c0_52 = arith.constant 0 : index
    %c0_53 = arith.constant 0 : index
    %119 = vector.load %arg8[%c0_52, %c0_53] : memref<128x128xbf16, #tpu.memory_space<vmem>>, vector<128x128xbf16>
    %cst_54 = arith.constant dense<0.000000e+00> : vector<8x128xf32>
    %120 = tpu.matmul %118, %119, %cst_54 {dimension_numbers = #tpu.dot_dimension_numbers<[1], [0], [0], [1], [0, 0, 1, 1], [], []>} : vector<8x128xbf16>, vector<128x128xbf16>, vector<8x128xf32> -> vector<8x128xf32>
    %c0_55 = arith.constant 0 : index
    %c0_56 = arith.constant 0 : index
    %121 = vector.load %arg9[%c0_55, %c0_56] : memref<1x128xf32, #tpu.memory_space<vmem>>, vector<1x128xf32>
    %122 = vector.broadcast %121 : vector<1x128xf32> to vector<8x128xf32>
    %123 = arith.addf %120, %122 : vector<8x128xf32>
    %c0_57 = arith.constant 0 : index
    %c0_58 = arith.constant 0 : index
    %124 = vector.load %arg14[%c0_57, %c0_58] : memref<8x128xf32, #tpu.memory_space<vmem>>, vector<8x128xf32>
    tpu.vector_store %arg14[%c0_57, %c0_58], %123 {strides = array<i32>} : memref<8x128xf32, #tpu.memory_space<vmem>>, vector<8x128xf32>,
    return
  }
  func.func @transform_0(%arg0: i32) -> (i32, i32) {
    %c0_i32 = arith.constant 0 : i32
    %c0_i32_0 = arith.constant 0 : i32
    return %arg0, %c0_i32 : i32, i32
  }
  func.func @transform_1(%arg0: i32) -> (i32, i32) {
    %c0_i32 = arith.constant 0 : i32
    %c0_i32_0 = arith.constant 0 : i32
    %c0_i32_1 = arith.constant 0 : i32
    return %c0_i32, %c0_i32_0 : i32, i32
  }
  func.func @transform_2(%arg0: i32) -> (i32, i32) {
    %c0_i32 = arith.constant 0 : i32
    %c0_i32_0 = arith.constant 0 : i32
    %c0_i32_1 = arith.constant 0 : i32
    return %c0_i32, %c0_i32_0 : i32, i32
  }
  func.func @transform_3(%arg0: i32) -> (i32, i32) {
    %c0_i32 = arith.constant 0 : i32
    %c0_i32_0 = arith.constant 0 : i32
    %c0_i32_1 = arith.constant 0 : i32
    return %c0_i32, %c0_i32_0 : i32, i32
  }
  func.func @transform_4(%arg0: i32) -> (i32, i32) {
    %c0_i32 = arith.constant 0 : i32
    %c0_i32_0 = arith.constant 0 : i32
    %c0_i32_1 = arith.constant 0 : i32
    return %c0_i32, %c0_i32_0 : i32, i32
  }
  func.func @transform_5(%arg0: i32) -> (i32, i32) {
    %c0_i32 = arith.constant 0 : i32
    %c0_i32_0 = arith.constant 0 : i32
    %c0_i32_1 = arith.constant 0 : i32
    return %c0_i32, %c0_i32_0 : i32, i32
  }
  func.func @transform_6(%arg0: i32) -> (i32, i32) {
    %c0_i32 = arith.constant 0 : i32
    %c0_i32_0 = arith.constant 0 : i32
    %c0_i32_1 = arith.constant 0 : i32
    return %c0_i32, %c0_i32_0 : i32, i32
  }
  func.func @transform_7(%arg0: i32) -> (i32, i32) {
    %c0_i32 = arith.constant 0 : i32
    %c0_i32_0 = arith.constant 0 : i32
    %c0_i32_1 = arith.constant 0 : i32
    return %c0_i32, %c0_i32_0 : i32, i32
  }
  func.func @transform_8(%arg0: i32) -> (i32, i32) {
    %c0_i32 = arith.constant 0 : i32
    %c0_i32_0 = arith.constant 0 : i32
    %c0_i32_1 = arith.constant 0 : i32
    return %c0_i32, %c0_i32_0 : i32, i32
  }
  func.func @transform_9(%arg0: i32) -> (i32, i32) {
    %c0_i32 = arith.constant 0 : i32
    %c0_i32_0 = arith.constant 0 : i32
    %c0_i32_1 = arith.constant 0 : i32
    return %c0_i32, %c0_i32_0 : i32, i32
  }
  func.func @transform_10(%arg0: i32) -> (i32, i32) {
    %c0_i32 = arith.constant 0 : i32
    %c0_i32_0 = arith.constant 0 : i32
    %c0_i32_1 = arith.constant 0 : i32
    return %c0_i32, %c0_i32_0 : i32, i32
  }
  func.func @transform_11(%arg0: i32) -> (i32, i32) {
    %c0_i32 = arith.constant 0 : i32
    %c0_i32_0 = arith.constant 0 : i32
    %c0_i32_1 = arith.constant 0 : i32
    return %c0_i32, %c0_i32_0 : i32, i32
  }
  func.func @transform_12(%arg0: i32) -> (i32, i32) {
    %c0_i32 = arith.constant 0 : i32
    %c0_i32_0 = arith.constant 0 : i32
    %c0_i32_1 = arith.constant 0 : i32
    return %c0_i32, %c0_i32_0 : i32, i32
  }
  func.func @transform_13(%arg0: i32) -> (i32, i32) {
    %c0_i32 = arith.constant 0 : i32
    %c0_i32_0 = arith.constant 0 : i32
    return %arg0, %c0_i32 : i32, i32
  }
}

</mosaic_0001>

<llo_original>
// kernel: a_call__.1
$region0: #{a_call__.1}
  #allocation0 [shape = 'u32[]', space=smem, size = 0x4, offset = 0x4, fixed_abs, tag = 'smem constant byte address 0x4 - core index']
  #allocation1 [shape = 'u32[144,128]{1,0:T(1,128)}', space=vmem, size = 0x12000, scoped, tag = 'internal scratch']
  %s0 = inlined_call_operand.vmem [shape: f32[8,128], index: 0, kind: input, shape index: {}]
  %s1 = inlined_call_operand.vmem [shape: bf16[128,128], index: 1, kind: input, shape index: {}]
  %s2 = inlined_call_operand.vmem [shape: f32[1,128], index: 2, kind: input, shape index: {}]
  %s3 = inlined_call_operand.vmem [shape: bf16[128,384], index: 3, kind: input, shape index: {}]
  %s4 = inlined_call_operand.vmem [shape: f32[1,384], index: 4, kind: input, shape index: {}]
  %s5 = inlined_call_operand.vmem [shape: bf16[128,128], index: 5, kind: input, shape index: {}]
  %s6 = inlined_call_operand.vmem [shape: f32[1,128], index: 6, kind: input, shape index: {}]
  %s7 = inlined_call_operand.vmem [shape: bf16[128,128], index: 7, kind: input, shape index: {}]
  %s8 = inlined_call_operand.vmem [shape: f32[1,128], index: 8, kind: input, shape index: {}]
  %s9 = inlined_call_operand.vmem [shape: f32[32,128], index: 9, kind: input, shape index: {}]
  %s10 = inlined_call_operand.vmem [shape: f32[128,16], index: 10, kind: input, shape index: {}]
  %s11 = inlined_call_operand.vmem [shape: f32[16,128], index: 11, kind: input, shape index: {}]
  %s12 = inlined_call_operand.vmem [shape: f32[4,16], index: 12, kind: input, shape index: {}]
  %s13 = inlined_call_operand.vmem [shape: f32[8,128], index: 13, kind: output, shape index: {}]
  %s14 = sld [smem:[#allocation0]]
  $region62: #{a_call__.1} parent=0
    _
  %s16 = ssub.s32 1, %s14
  %s17 = scalar_select 0, %s16, %s14
  // Predicated region
  $region2: #{a_call__.1} parent=0 // pred_check
    _
  $region3: #{a_call__.1} parent=0 // pred_check_branch
    %19 = sbr.rel (0) target = $region5
  $region4: #{a_call__.1} parent=0 // pred_region
    _
  $region5: #{a_call__.1} parent=0 // pred_fallthru
    _
  // Predicated region
  $region6: #{a_call__.1} parent=0 // pred_check
    _
  $region7: #{a_call__.1} parent=0 // pred_check_branch
    %21 = sbr.rel (0) target = $region9
  $region8: #{a_call__.1} parent=0 // pred_region
    _
  $region9: #{a_call__.1} parent=0 // pred_fallthru
    _
  // Predicated region
  $region10: #{a_call__.1} parent=0 // pred_check
    _
  $region11: #{a_call__.1} parent=0 // pred_check_branch
    %23 = sbr.rel (0) target = $region13
  $region12: #{a_call__.1} parent=0 // pred_region
    _
  $region13: #{a_call__.1} parent=0 // pred_fallthru
    _
  // Predicated region
  $region14: #{a_call__.1} parent=0 // pred_check
    _
  $region15: #{a_call__.1} parent=0 // pred_check_branch
    %25 = sbr.rel (0) target = $region17
  $region16: #{a_call__.1} parent=0 // pred_region
    _
  $region17: #{a_call__.1} parent=0 // pred_fallthru
    _
  // Predicated region
  $region18: #{a_call__.1} parent=0 // pred_check
    _
  $region19: #{a_call__.1} parent=0 // pred_check_branch
    %27 = sbr.rel (0) target = $region21
  $region20: #{a_call__.1} parent=0 // pred_region
    _
  $region21: #{a_call__.1} parent=0 // pred_fallthru
    _
  // Predicated region
  $region22: #{a_call__.1} parent=0 // pred_check
    _
  $region23: #{a_call__.1} parent=0 // pred_check_branch
    %29 = sbr.rel (0) target = $region25
  $region24: #{a_call__.1} parent=0 // pred_region
    _
  $region25: #{a_call__.1} parent=0 // pred_fallthru
    _
  // Predicated region
  $region26: #{a_call__.1} parent=0 // pred_check
    _
  $region27: #{a_call__.1} parent=0 // pred_check_branch
    %31 = sbr.rel (0) target = $region29
  $region28: #{a_call__.1} parent=0 // pred_region
    _
  $region29: #{a_call__.1} parent=0 // pred_fallthru
    _
  // Predicated region
  $region30: #{a_call__.1} parent=0 // pred_check
    _
  $region31: #{a_call__.1} parent=0 // pred_check_branch
    %33 = sbr.rel (0) target = $region33
  $region32: #{a_call__.1} parent=0 // pred_region
    _
  $region33: #{a_call__.1} parent=0 // pred_fallthru
    _
  // Predicated region
  $region34: #{a_call__.1} parent=0 // pred_check
    _
  $region35: #{a_call__.1} parent=0 // pred_check_branch
    %35 = sbr.rel (0) target = $region37
  $region36: #{a_call__.1} parent=0 // pred_region
    _
  $region37: #{a_call__.1} parent=0 // pred_fallthru
    _
  // Predicated region
  $region38: #{a_call__.1} parent=0 // pred_check
    _
  $region39: #{a_call__.1} parent=0 // pred_check_branch
    %37 = sbr.rel (0) target = $region41
  $region40: #{a_call__.1} parent=0 // pred_region
    _
  $region41: #{a_call__.1} parent=0 // pred_fallthru
    _
  // Predicated region
  $region42: #{a_call__.1} parent=0 // pred_check
    _
  $region43: #{a_call__.1} parent=0 // pred_check_branch
    %39 = sbr.rel (0) target = $region45
  $region44: #{a_call__.1} parent=0 // pred_region
    _
  $region45: #{a_call__.1} parent=0 // pred_fallthru
    _
  // Predicated region
  $region46: #{a_call__.1} parent=0 // pred_check
    _
  $region47: #{a_call__.1} parent=0 // pred_check_branch
    %41 = sbr.rel (0) target = $region49
  $region48: #{a_call__.1} parent=0 // pred_region
    _
  $region49: #{a_call__.1} parent=0 // pred_fallthru
    _
  // Predicated region
  $region50: #{a_call__.1} parent=0 // pred_check
    _
  $region51: #{a_call__.1} parent=0 // pred_check_branch
    %43 = sbr.rel (0) target = $region53
  $region52: #{a_call__.1} parent=0 // pred_region
    _
  $region53: #{a_call__.1} parent=0 // pred_fallthru
    _
  %v45 = vld [vmem:[%s0] sm:$0xff]
  %v46 = vpack.c.bf16 %v45, %v45
  %v47 = vld [vmem:[%s1] sm:$0xf]
  %v48 = vld [vmem:[%s1 + $0x4] sm:$0xf]
  %v49 = vld [vmem:[%s1 + $0x8] sm:$0xf]
  %v50 = vld [vmem:[%s1 + $0xc] sm:$0xf]
  %v51 = vld [vmem:[%s1 + $0x10] sm:$0xf]
  %v52 = vld [vmem:[%s1 + $0x14] sm:$0xf]
  %v53 = vld [vmem:[%s1 + $0x18] sm:$0xf]
  %v54 = vld [vmem:[%s1 + $0x1c] sm:$0xf]
  %v55 = vld [vmem:[%s1 + $0x20] sm:$0xf]
  %v56 = vld [vmem:[%s1 + $0x24] sm:$0xf]
  %v57 = vld [vmem:[%s1 + $0x28] sm:$0xf]
  %v58 = vld [vmem:[%s1 + $0x2c] sm:$0xf]
  %v59 = vld [vmem:[%s1 + $0x30] sm:$0xf]
  %v60 = vld [vmem:[%s1 + $0x34] sm:$0xf]
  %v61 = vld [vmem:[%s1 + $0x38] sm:$0xf]
  %v62 = vld [vmem:[%s1 + $0x3c] sm:$0xf]
  %v63 = vld [vmem:[%s2] sm:$0x1]
  %v65 = vlaneseq
  %v66 = vshrl.u32 %v65, 7
  %v67 = vsub.s32 0, %v66
  %v68 = vrot.slane %v63, %v67
  %v86 = vunpack.c.l.b16 %v47
  %v87 = vunpack.c.l.b16 %v48
  %v88 = vunpack.c.l.b16 %v49
  %v89 = vunpack.c.l.b16 %v50
  %v90 = vunpack.c.l.b16 %v51
  %v91 = vunpack.c.l.b16 %v52
  %v92 = vunpack.c.l.b16 %v53
  %v93 = vunpack.c.l.b16 %v54
  %v94 = vunpack.c.l.b16 %v55
  %v95 = vunpack.c.l.b16 %v56
  %v96 = vunpack.c.l.b16 %v57
  %v97 = vunpack.c.l.b16 %v58
  %v98 = vunpack.c.l.b16 %v59
  %v99 = vunpack.c.l.b16 %v60
  %v100 = vunpack.c.l.b16 %v61
  %v101 = vunpack.c.l.b16 %v62
  %v102 = vpack.c.b16 %v87, %v86
  %v103 = vpack.c.b16 %v89, %v88
  %v104 = vpack.c.b16 %v91, %v90
  %v105 = vpack.c.b16 %v93, %v92
  %v106 = vpack.c.b16 %v95, %v94
  %v107 = vpack.c.b16 %v97, %v96
  %v108 = vpack.c.b16 %v99, %v98
  %v109 = vpack.c.b16 %v101, %v100
  %118 = vmatprep.subr.bf16.mxu0 0
  %119 = vmatpush1.bf16.msra.mxu0 %v102
  %120 = vmatprep.subr.bf16.mxu0 0
  %121 = vmatpush1.bf16.msra.mxu0 %v103
  %122 = vmatprep.subr.bf16.mxu0 0
  %123 = vmatpush1.bf16.msra.mxu0 %v104
  %124 = vmatprep.subr.bf16.mxu0 0
  %125 = vmatpush1.bf16.msra.mxu0 %v105
  %126 = vmatprep.subr.bf16.mxu0 0
  %127 = vmatpush1.bf16.msra.mxu0 %v106
  %128 = vmatprep.subr.bf16.mxu0 0
  %129 = vmatpush1.bf16.msra.mxu0 %v107
  %130 = vmatprep.subr.bf16.mxu0 0
  %131 = vmatpush1.bf16.msra.mxu0 %v108
  %132 = vmatprep.subr.bf16.mxu0 0
  %133 = vmatpush1.bf16.msra.mxu0 %v109
  %134 = vmatprep.subr.bf16.mxu0 0
  %135 = vmatpush1.bf16.msra.mxu0 0
  %136 = vmatprep.subr.bf16.mxu0 0
  %137 = vmatpush1.bf16.msra.mxu0 0
  %138 = vmatprep.subr.bf16.mxu0 0
  %139 = vmatpush1.bf16.msra.mxu0 0
  %140 = vmatprep.subr.bf16.mxu0 0
  %141 = vmatpush1.bf16.msra.mxu0 0
  %142 = vmatprep.subr.bf16.mxu0 0
  %143 = vmatpush1.bf16.msra.mxu0 0
  %144 = vmatprep.subr.bf16.mxu0 0
  %145 = vmatpush1.bf16.msra.mxu0 0
  %146 = vmatprep.subr.bf16.mxu0 0
  %147 = vmatpush1.bf16.msra.mxu0 0
  %148 = vmatprep.subr.bf16.mxu0 0
  %149 = vmatpush1.bf16.msra.mxu0 0
  %150 = vmatprep.mubr.bf16.mxu0 0
  %151 = vmatmul.mubr.bf16.gmra.mrb[0].mxu0 %v46
  %v152 = vpop.f32.mrb[0].mxu0
  %v153 = vadd.f32 %v68, %v152
  %v154 = vpop.f32.mrb[0].mxu0
  %v155 = vpop.f32.mrb[0].mxu0
  %v156 = vpop.f32.mrb[0].mxu0
  %157 = vdwg.mxu0
  %v158 = vpack.c.bf16 %v153, %v153
  %v159 = vld [vmem:[%s3] sm:$0xff]
  %v160 = vld [vmem:[%s3 + $0x8] sm:$0xf]
  %v161 = vld [vmem:[%s3 + $0xc] sm:$0xff]
  %v162 = vld [vmem:[%s3 + $0x14] sm:$0xf]
  %v163 = vld [vmem:[%s3 + $0x18] sm:$0xff]
  %v164 = vld [vmem:[%s3 + $0x20] sm:$0xf]
  %v165 = vld [vmem:[%s3 + $0x24] sm:$0xff]
  %v166 = vld [vmem:[%s3 + $0x2c] sm:$0xf]
  %v167 = vld [vmem:[%s3 + $0x30] sm:$0xff]
  %v168 = vld [vmem:[%s3 + $0x38] sm:$0xf]
  %v169 = vld [vmem:[%s3 + $0x3c] sm:$0xff]
  %v170 = vld [vmem:[%s3 + $0x44] sm:$0xf]
  %v171 = vld [vmem:[%s3 + $0x48] sm:$0xff]
  %v172 = vld [vmem:[%s3 + $0x50] sm:$0xf]
  %v173 = vld [vmem:[%s3 + $0x54] sm:$0xff]
  %v174 = vld [vmem:[%s3 + $0x5c] sm:$0xf]
  %v175 = vld [vmem:[%s3 + $0x60] sm:$0xff]
  %v176 = vld [vmem:[%s3 + $0x68] sm:$0xf]
  %v177 = vld [vmem:[%s3 + $0x6c] sm:$0xff]
  %v178 = vld [vmem:[%s3 + $0x74] sm:$0xf]
  %v179 = vld [vmem:[%s3 + $0x78] sm:$0xff]
  %v180 = vld [vmem:[%s3 + $0x80] sm:$0xf]
  %v181 = vld [vmem:[%s3 + $0x84] sm:$0xff]
  %v182 = vld [vmem:[%s3 + $0x8c] sm:$0xf]
  %v183 = vld [vmem:[%s3 + $0x90] sm:$0xff]
  %v184 = vld [vmem:[%s3 + $0x98] sm:$0xf]
  %v185 = vld [vmem:[%s3 + $0x9c] sm:$0xff]
  %v186 = vld [vmem:[%s3 + $0xa4] sm:$0xf]
  %v187 = vld [vmem:[%s3 + $0xa8] sm:$0xff]
  %v188 = vld [vmem:[%s3 + $0xb0] sm:$0xf]
  %v189 = vld [vmem:[%s3 + $0xb4] sm:$0xff]
  %v190 = vld [vmem:[%s3 + $0xbc] sm:$0xf]
  %v191 = vld [vmem:[%s4] sm:$0x7]
  %v193 = vlaneseq
  %v194 = vshrl.u32 %v193, 7
  %v195 = vsub.s32 0, %v194
  %v196 = vrot.slane %v191, %v195
  %v197 = vlaneseq
  %v198 = vshrl.u32 %v197, 7
  %v199 = vsub.s32 1, %v198
  %v200 = vrot.slane %v191, %v199
  %v201 = vlaneseq
  %v202 = vshrl.u32 %v201, 7
  %v203 = vsub.s32 2, %v202
  %v204 = vrot.slane %v191, %v203
  %v240 = vunpack.c.l.b16 %v159
  %v241 = vunpack.c.h.b16 %v159
  %v242 = vunpack.c.l.b16 %v160
  %v243 = vunpack.c.l.b16 %v161
  %v244 = vunpack.c.h.b16 %v161
  %v245 = vunpack.c.l.b16 %v162
  %v246 = vunpack.c.l.b16 %v163
  %v247 = vunpack.c.h.b16 %v163
  %v248 = vunpack.c.l.b16 %v164
  %v249 = vunpack.c.l.b16 %v165
  %v250 = vunpack.c.h.b16 %v165
  %v251 = vunpack.c.l.b16 %v166
  %v252 = vunpack.c.l.b16 %v167
  %v253 = vunpack.c.h.b16 %v167
  %v254 = vunpack.c.l.b16 %v168
  %v255 = vunpack.c.l.b16 %v169
  %v256 = vunpack.c.h.b16 %v169
  %v257 = vunpack.c.l.b16 %v170
  %v258 = vunpack.c.l.b16 %v171
  %v259 = vunpack.c.h.b16 %v171
  %v260 = vunpack.c.l.b16 %v172
  %v261 = vunpack.c.l.b16 %v173
  %v262 = vunpack.c.h.b16 %v173
  %v263 = vunpack.c.l.b16 %v174
  %v264 = vunpack.c.l.b16 %v175
  %v265 = vunpack.c.h.b16 %v175
  %v266 = vunpack.c.l.b16 %v176
  %v267 = vunpack.c.l.b16 %v177
  %v268 = vunpack.c.h.b16 %v177
  %v269 = vunpack.c.l.b16 %v178
  %v270 = vunpack.c.l.b16 %v179
  %v271 = vunpack.c.h.b16 %v179
  %v272 = vunpack.c.l.b16 %v180
  %v273 = vunpack.c.l.b16 %v181
  %v274 = vunpack.c.h.b16 %v181
  %v275 = vunpack.c.l.b16 %v182
  %v276 = vunpack.c.l.b16 %v183
  %v277 = vunpack.c.h.b16 %v183
  %v278 = vunpack.c.l.b16 %v184
  %v279 = vunpack.c.l.b16 %v185
  %v280 = vunpack.c.h.b16 %v185
  %v281 = vunpack.c.l.b16 %v186
  %v282 = vunpack.c.l.b16 %v187
  %v283 = vunpack.c.h.b16 %v187
  %v284 = vunpack.c.l.b16 %v188
  %v285 = vunpack.c.l.b16 %v189
  %v286 = vunpack.c.h.b16 %v189
  %v287 = vunpack.c.l.b16 %v190
  %v288 = vpack.c.b16 %v243, %v240
  %v289 = vpack.c.b16 %v244, %v241
  %v290 = vpack.c.b16 %v245, %v242
  %v291 = vpack.c.b16 %v249, %v246
  %v292 = vpack.c.b16 %v250, %v247
  %v293 = vpack.c.b16 %v251, %v248
  %v294 = vpack.c.b16 %v255, %v252
  %v295 = vpack.c.b16 %v256, %v253
  %v296 = vpack.c.b16 %v257, %v254
  %v297 = vpack.c.b16 %v261, %v258
  %v298 = vpack.c.b16 %v262, %v259
  %v299 = vpack.c.b16 %v263, %v260
  %v300 = vpack.c.b16 %v267, %v264
  %v301 = vpack.c.b16 %v268, %v265
  %v302 = vpack.c.b16 %v269, %v266
  %v303 = vpack.c.b16 %v273, %v270
  %v304 = vpack.c.b16 %v274, %v271
  %v305 = vpack.c.b16 %v275, %v272
  %v306 = vpack.c.b16 %v279, %v276
  %v307 = vpack.c.b16 %v280, %v277
  %v308 = vpack.c.b16 %v281, %v278
  %v309 = vpack.c.b16 %v285, %v282
  %v310 = vpack.c.b16 %v286, %v283
  %v311 = vpack.c.b16 %v287, %v284
  %336 = vmatprep.subr.bf16.mxu0 %v289
  %337 = vmatpush1.bf16.msra.mxu0 %v288
  %338 = vmatprep.subr.bf16.mxu0 %v292
  %339 = vmatpush1.bf16.msra.mxu0 %v291
  %340 = vmatprep.subr.bf16.mxu0 %v295
  %341 = vmatpush1.bf16.msra.mxu0 %v294
  %342 = vmatprep.subr.bf16.mxu0 %v298
  %343 = vmatpush1.bf16.msra.mxu0 %v297
  %344 = vmatprep.subr.bf16.mxu0 %v301
  %345 = vmatpush1.bf16.msra.mxu0 %v300
  %346 = vmatprep.subr.bf16.mxu0 %v304
  %347 = vmatpush1.bf16.msra.mxu0 %v303
  %348 = vmatprep.subr.bf16.mxu0 %v307
  %349 = vmatpush1.bf16.msra.mxu0 %v306
  %350 = vmatprep.subr.bf16.mxu0 %v310
  %351 = vmatpush1.bf16.msra.mxu0 %v309
  %352 = vmatprep.subr.bf16.mxu0 0
  %353 = vmatpush1.bf16.msra.mxu0 0
  %354 = vmatprep.subr.bf16.mxu0 0
  %355 = vmatpush1.bf16.msra.mxu0 0
  %356 = vmatprep.subr.bf16.mxu0 0
  %357 = vmatpush1.bf16.msra.mxu0 0
  %358 = vmatprep.subr.bf16.mxu0 0
  %359 = vmatpush1.bf16.msra.mxu0 0
  %360 = vmatprep.subr.bf16.mxu0 0
  %361 = vmatpush1.bf16.msra.mxu0 0
  %362 = vmatprep.subr.bf16.mxu0 0
  %363 = vmatpush1.bf16.msra.mxu0 0
  %364 = vmatprep.subr.bf16.mxu0 0
  %365 = vmatpush1.bf16.msra.mxu0 0
  %366 = vmatprep.subr.bf16.mxu0 0
  %367 = vmatpush1.bf16.msra.mxu0 0
  %368 = vmatprep.mubr.bf16.mxu0 0
  %369 = vmatmul.mubr.bf16.gmra.mrb[0].mxu0 %v158
  %v370 = vpop.f32.mrb[0].mxu0
  %v371 = vadd.f32 %v196, %v370
  %v372 = vpop.f32.mrb[0].mxu0
  %v373 = vadd.f32 %v200, %v372
  %v374 = vpop.f32.mrb[0].mxu0
  %v375 = vpop.f32.mrb[0].mxu0
  %376 = vdwg.mxu0
  %377 = vmatprep.subr.bf16.mxu0 0
  %378 = vmatpush1.bf16.msra.mxu0 %v290
  %379 = vmatprep.subr.bf16.mxu0 0
  %380 = vmatpush1.bf16.msra.mxu0 %v293
  %381 = vmatprep.subr.bf16.mxu0 0
  %382 = vmatpush1.bf16.msra.mxu0 %v296
  %383 = vmatprep.subr.bf16.mxu0 0
  %384 = vmatpush1.bf16.msra.mxu0 %v299
  %385 = vmatprep.subr.bf16.mxu0 0
  %386 = vmatpush1.bf16.msra.mxu0 %v302
  %387 = vmatprep.subr.bf16.mxu0 0
  %388 = vmatpush1.bf16.msra.mxu0 %v305
  %389 = vmatprep.subr.bf16.mxu0 0
  %390 = vmatpush1.bf16.msra.mxu0 %v308
  %391 = vmatprep.subr.bf16.mxu0 0
  %392 = vmatpush1.bf16.msra.mxu0 %v311
  %393 = vmatprep.subr.bf16.mxu0 0
  %394 = vmatpush1.bf16.msra.mxu0 0
  %395 = vmatprep.subr.bf16.mxu0 0
  %396 = vmatpush1.bf16.msra.mxu0 0
  %397 = vmatprep.subr.bf16.mxu0 0
  %398 = vmatpush1.bf16.msra.mxu0 0
  %399 = vmatprep.subr.bf16.mxu0 0
  %400 = vmatpush1.bf16.msra.mxu0 0
  %401 = vmatprep.subr.bf16.mxu0 0
  %402 = vmatpush1.bf16.msra.mxu0 0
  %403 = vmatprep.subr.bf16.mxu0 0
  %404 = vmatpush1.bf16.msra.mxu0 0
  %405 = vmatprep.subr.bf16.mxu0 0
  %406 = vmatpush1.bf16.msra.mxu0 0
  %407 = vmatprep.subr.bf16.mxu0 0
  %408 = vmatpush1.bf16.msra.mxu0 0
  %409 = vmatprep.mubr.bf16.mxu0 0
  %410 = vmatmul.mubr.bf16.gmra.mrb[0].mxu0 %v158
  %v411 = vpop.f32.mrb[0].mxu0
  %v412 = vadd.f32 %v204, %v411
  %v413 = vpop.f32.mrb[0].mxu0
  %v414 = vpop.f32.mrb[0].mxu0
  %v415 = vpop.f32.mrb[0].mxu0
  %416 = vdwg.mxu0
  %v417 = vld [vmem:[%s9] sm:$0xff]
  %v418 = vld [vmem:[%s9 + $0x8] sm:$0xff]
  %v419 = vld [vmem:[%s9 + $0x10] sm:$0xff]
  %v420 = vld [vmem:[%s9 + $0x18] sm:$0xff]
  %v421 = vld [vmem:[%s10] sm:$0xff]
  %v422 = vld [vmem:[%s10 + $0x8] sm:$0xff]
  %v423 = vld [vmem:[%s10 + $0x10] sm:$0xff]
  %v424 = vld [vmem:[%s10 + $0x18] sm:$0xff]
  %v425 = vld [vmem:[%s10 + $0x20] sm:$0xff]
  %v426 = vld [vmem:[%s10 + $0x28] sm:$0xff]
  %v427 = vld [vmem:[%s10 + $0x30] sm:$0xff]
  %v428 = vld [vmem:[%s10 + $0x38] sm:$0xff]
  %v429 = vld [vmem:[%s10 + $0x40] sm:$0xff]
  %v430 = vld [vmem:[%s10 + $0x48] sm:$0xff]
  %v431 = vld [vmem:[%s10 + $0x50] sm:$0xff]
  %v432 = vld [vmem:[%s10 + $0x58] sm:$0xff]
  %v433 = vld [vmem:[%s10 + $0x60] sm:$0xff]
  %v434 = vld [vmem:[%s10 + $0x68] sm:$0xff]
  %v435 = vld [vmem:[%s10 + $0x70] sm:$0xff]
  %v436 = vld [vmem:[%s10 + $0x78] sm:$0xff]
  %v437 = vld [vmem:[%s11] sm:$0xff]
  %v438 = vld [vmem:[%s11 + $0x8] sm:$0xff]
  %v439 = vld [vmem:[%s12] sm:$0xf]
  %vm440 = vcmask 261120
  %v442 = vsel %vm440, %v373, 0
  %444 = vmatprep.subr.mxu0 0.0
  %445 = vmatpush1.msra.mxu0 %v417
  %446 = vmatprep.subr.mxu0 0.0
  %447 = vmatpush1.msra.mxu0 %v418
  %448 = vmatprep.subr.mxu0 0.0
  %449 = vmatpush1.msra.mxu0 %v419
  %450 = vmatprep.subr.mxu0 0.0
  %451 = vmatpush1.msra.mxu0 %v420
  %452 = vmatprep.subr.mxu0 0.0
  %453 = vmatpush1.msra.mxu0 0.0
  %454 = vmatprep.subr.mxu0 0.0
  %455 = vmatpush1.msra.mxu0 0.0
  %456 = vmatprep.subr.mxu0 0.0
  %457 = vmatpush1.msra.mxu0 0.0
  %458 = vmatprep.subr.mxu0 0.0
  %459 = vmatpush1.msra.mxu0 0.0
  %460 = vmatprep.subr.mxu0 0.0
  %461 = vmatpush1.msra.mxu0 0.0
  %462 = vmatprep.subr.mxu0 0.0
  %463 = vmatpush1.msra.mxu0 0.0
  %464 = vmatprep.subr.mxu0 0.0
  %465 = vmatpush1.msra.mxu0 0.0
  %466 = vmatprep.subr.mxu0 0.0
  %467 = vmatpush1.msra.mxu0 0.0
  %468 = vmatprep.subr.mxu0 0.0
  %469 = vmatpush1.msra.mxu0 0.0
  %470 = vmatprep.subr.mxu0 0.0
  %471 = vmatpush1.msra.mxu0 0.0
  %472 = vmatprep.subr.mxu0 0.0
  %473 = vmatpush1.msra.mxu0 0.0
  %474 = vmatprep.subr.mxu0 0.0
  %475 = vmatpush1.msra.mxu0 0.0
  %476 = vmatprep.subr.mxu0 0.0
  %477 = vmatpush1.msra.mxu0 0.0
  %478 = vmatprep.subr.mxu0 0.0
  %479 = vmatpush1.msra.mxu0 0.0
  %480 = vmatprep.subr.mxu0 0.0
  %481 = vmatpush1.msra.mxu0 0.0
  %482 = vmatprep.subr.mxu0 0.0
  %483 = vmatpush1.msra.mxu0 0.0
  %484 = vmatprep.subr.mxu0 0.0
  %485 = vmatpush1.msra.mxu0 0.0
  %486 = vmatprep.subr.mxu0 0.0
  %487 = vmatpush1.msra.mxu0 0.0
  %488 = vmatprep.subr.mxu0 0.0
  %489 = vmatpush1.msra.mxu0 0.0
  %490 = vmatprep.subr.mxu0 0.0
  %491 = vmatpush1.msra.mxu0 0.0
  %492 = vmatprep.subr.mxu0 0.0
  %493 = vmatpush1.msra.mxu0 0.0
  %494 = vmatprep.subr.mxu0 0.0
  %495 = vmatpush1.msra.mxu0 0.0
  %496 = vmatprep.subr.mxu0 0.0
  %497 = vmatpush1.msra.mxu0 0.0
  %498 = vmatprep.subr.mxu0 0.0
  %499 = vmatpush1.msra.mxu0 0.0
  %500 = vmatprep.subr.mxu0 0.0
  %501 = vmatpush1.msra.mxu0 0.0
  %502 = vmatprep.subr.mxu0 0.0
  %503 = vmatpush1.msra.mxu0 0.0
  %504 = vmatprep.subr.mxu0 0.0
  %505 = vmatpush1.msra.mxu0 0.0
  %506 = vmatprep.subr.mxu0 0.0
  %507 = vmatpush1.msra.mxu0 0.0
  %508 = vmatprep.mubr.f32.mxu0 0.0
  %509 = vmatmul.mubr.f32.gmra.mrb[0].mxu0 %v442
  %v510 = vpop.f32.mrb[0].mxu0
  %v511 = vadd.f32 0.0, %v510
  %v512 = vpop.f32.mrb[0].mxu0
  %513 = vdwg.mxu0
  %v514 = vmul.f32 %v371, %v511
  %515 = vmatprep.subr.mxu0 0.0
  %516 = vmatpush1.msra.mxu0 %v421
  %517 = vmatprep.subr.mxu0 0.0
  %518 = vmatpush1.msra.mxu0 %v422
  %519 = vmatprep.subr.mxu0 0.0
  %520 = vmatpush1.msra.mxu0 %v423
  %521 = vmatprep.subr.mxu0 0.0
  %522 = vmatpush1.msra.mxu0 %v424
  %523 = vmatprep.subr.mxu0 0.0
  %524 = vmatpush1.msra.mxu0 %v425
  %525 = vmatprep.subr.mxu0 0.0
  %526 = vmatpush1.msra.mxu0 %v426
  %527 = vmatprep.subr.mxu0 0.0
  %528 = vmatpush1.msra.mxu0 %v427
  %529 = vmatprep.subr.mxu0 0.0
  %530 = vmatpush1.msra.mxu0 %v428
  %531 = vmatprep.subr.mxu0 0.0
  %532 = vmatpush1.msra.mxu0 %v429
  %533 = vmatprep.subr.mxu0 0.0
  %534 = vmatpush1.msra.mxu0 %v430
  %535 = vmatprep.subr.mxu0 0.0
  %536 = vmatpush1.msra.mxu0 %v431
  %537 = vmatprep.subr.mxu0 0.0
  %538 = vmatpush1.msra.mxu0 %v432
  %539 = vmatprep.subr.mxu0 0.0
  %540 = vmatpush1.msra.mxu0 %v433
  %541 = vmatprep.subr.mxu0 0.0
  %542 = vmatpush1.msra.mxu0 %v434
  %543 = vmatprep.subr.mxu0 0.0
  %544 = vmatpush1.msra.mxu0 %v435
  %545 = vmatprep.subr.mxu0 0.0
  %546 = vmatpush1.msra.mxu0 %v436
  %547 = vmatprep.subr.mxu0 0.0
  %548 = vmatpush1.msra.mxu0 0.0
  %549 = vmatprep.subr.mxu0 0.0
  %550 = vmatpush1.msra.mxu0 0.0
  %551 = vmatprep.subr.mxu0 0.0
  %552 = vmatpush1.msra.mxu0 0.0
  %553 = vmatprep.subr.mxu0 0.0
  %554 = vmatpush1.msra.mxu0 0.0
  %555 = vmatprep.subr.mxu0 0.0
  %556 = vmatpush1.msra.mxu0 0.0
  %557 = vmatprep.subr.mxu0 0.0
  %558 = vmatpush1.msra.mxu0 0.0
  %559 = vmatprep.subr.mxu0 0.0
  %560 = vmatpush1.msra.mxu0 0.0
  %561 = vmatprep.subr.mxu0 0.0
  %562 = vmatpush1.msra.mxu0 0.0
  %563 = vmatprep.subr.mxu0 0.0
  %564 = vmatpush1.msra.mxu0 0.0
  %565 = vmatprep.subr.mxu0 0.0
  %566 = vmatpush1.msra.mxu0 0.0
  %567 = vmatprep.subr.mxu0 0.0
  %568 = vmatpush1.msra.mxu0 0.0
  %569 = vmatprep.subr.mxu0 0.0
  %570 = vmatpush1.msra.mxu0 0.0
  %571 = vmatprep.subr.mxu0 0.0
  %572 = vmatpush1.msra.mxu0 0.0
  %573 = vmatprep.subr.mxu0 0.0
  %574 = vmatpush1.msra.mxu0 0.0
  %575 = vmatprep.subr.mxu0 0.0
  %576 = vmatpush1.msra.mxu0 0.0
  %577 = vmatprep.subr.mxu0 0.0
  %578 = vmatpush1.msra.mxu0 0.0
  %579 = vmatprep.mubr.f32.mxu0 0.0
  %580 = vmatmul.mubr.f32.gmra.mrb[0].mxu0 %v514
  %v581 = vpop.f32.mrb[0].mxu0
  %v582 = vadd.f32 0.0, %v581
  %v583 = vpop.f32.mrb[0].mxu0
  %584 = vdwg.mxu0
  %v585 = vmul.f32 %v582, 0.35355338
  %vm586 = vcmp.eq.f32.partialorder %v439, 0.0
  %v587 = vsel %vm586, 1, 0
  %v588 = vlaneseq
  %v589 = vshrl.u32 %v588, 7
  %v590 = vsub.s32 0, %v589
  %v591 = vrot.slane %v587, %v590
  %vm592 = vcmp.eq.s32.totalorder %v591, 1
  %v593 = vsel %vm592, -9e+15, %v585
  %594 = vrot.lane.b32.xlu0 %v373, 96
  %v595 = vpop.permute.xlu0 %594
  %v596 = vsel %vm440, %v595, 0
  %598 = vmatprep.subr.mxu0 0.0
  %599 = vmatpush1.msra.mxu0 %v417
  %600 = vmatprep.subr.mxu0 0.0
  %601 = vmatpush1.msra.mxu0 %v418
  %602 = vmatprep.subr.mxu0 0.0
  %603 = vmatpush1.msra.mxu0 %v419
  %604 = vmatprep.subr.mxu0 0.0
  %605 = vmatpush1.msra.mxu0 %v420
  %606 = vmatprep.subr.mxu0 0.0
  %607 = vmatpush1.msra.mxu0 0.0
  %608 = vmatprep.subr.mxu0 0.0
  %609 = vmatpush1.msra.mxu0 0.0
  %610 = vmatprep.subr.mxu0 0.0
  %611 = vmatpush1.msra.mxu0 0.0
  %612 = vmatprep.subr.mxu0 0.0
  %613 = vmatpush1.msra.mxu0 0.0
  %614 = vmatprep.subr.mxu0 0.0
  %615 = vmatpush1.msra.mxu0 0.0
  %616 = vmatprep.subr.mxu0 0.0
  %617 = vmatpush1.msra.mxu0 0.0
  %618 = vmatprep.subr.mxu0 0.0
  %619 = vmatpush1.msra.mxu0 0.0
  %620 = vmatprep.subr.mxu0 0.0
  %621 = vmatpush1.msra.mxu0 0.0
  %622 = vmatprep.subr.mxu0 0.0
  %623 = vmatpush1.msra.mxu0 0.0
  %624 = vmatprep.subr.mxu0 0.0
  %625 = vmatpush1.msra.mxu0 0.0
  %626 = vmatprep.subr.mxu0 0.0
  %627 = vmatpush1.msra.mxu0 0.0
  %628 = vmatprep.subr.mxu0 0.0
  %629 = vmatpush1.msra.mxu0 0.0
  %630 = vmatprep.subr.mxu0 0.0
  %631 = vmatpush1.msra.mxu0 0.0
  %632 = vmatprep.subr.mxu0 0.0
  %633 = vmatpush1.msra.mxu0 0.0
  %634 = vmatprep.subr.mxu0 0.0
  %635 = vmatpush1.msra.mxu0 0.0
  %636 = vmatprep.subr.mxu0 0.0
  %637 = vmatpush1.msra.mxu0 0.0
  %638 = vmatprep.subr.mxu0 0.0
  %639 = vmatpush1.msra.mxu0 0.0
  %640 = vmatprep.subr.mxu0 0.0
  %641 = vmatpush1.msra.mxu0 0.0
  %642 = vmatprep.subr.mxu0 0.0
  %643 = vmatpush1.msra.mxu0 0.0
  %644 = vmatprep.subr.mxu0 0.0
  %645 = vmatpush1.msra.mxu0 0.0
  %646 = vmatprep.subr.mxu0 0.0
  %647 = vmatpush1.msra.mxu0 0.0
  %648 = vmatprep.subr.mxu0 0.0
  %649 = vmatpush1.msra.mxu0 0.0
  %650 = vmatprep.subr.mxu0 0.0
  %651 = vmatpush1.msra.mxu0 0.0
  %652 = vmatprep.subr.mxu0 0.0
  %653 = vmatpush1.msra.mxu0 0.0
  %654 = vmatprep.subr.mxu0 0.0
  %655 = vmatpush1.msra.mxu0 0.0
  %656 = vmatprep.subr.mxu0 0.0
  %657 = vmatpush1.msra.mxu0 0.0
  %658 = vmatprep.subr.mxu0 0.0
  %659 = vmatpush1.msra.mxu0 0.0
  %660 = vmatprep.subr.mxu0 0.0
  %661 = vmatpush1.msra.mxu0 0.0
  %662 = vmatprep.mubr.f32.mxu0 0.0
  %663 = vmatmul.mubr.f32.gmra.mrb[0].mxu0 %v596
  %v664 = vpop.f32.mrb[0].mxu0
  %v665 = vadd.f32 0.0, %v664
  %v666 = vpop.f32.mrb[0].mxu0
  %667 = vdwg.mxu0
  %v668 = vmul.f32 %v371, %v665
  %669 = vmatprep.subr.mxu0 0.0
  %670 = vmatpush1.msra.mxu0 %v421
  %671 = vmatprep.subr.mxu0 0.0
  %672 = vmatpush1.msra.mxu0 %v422
  %673 = vmatprep.subr.mxu0 0.0
  %674 = vmatpush1.msra.mxu0 %v423
  %675 = vmatprep.subr.mxu0 0.0
  %676 = vmatpush1.msra.mxu0 %v424
  %677 = vmatprep.subr.mxu0 0.0
  %678 = vmatpush1.msra.mxu0 %v425
  %679 = vmatprep.subr.mxu0 0.0
  %680 = vmatpush1.msra.mxu0 %v426
  %681 = vmatprep.subr.mxu0 0.0
  %682 = vmatpush1.msra.mxu0 %v427
  %683 = vmatprep.subr.mxu0 0.0
  %684 = vmatpush1.msra.mxu0 %v428
  %685 = vmatprep.subr.mxu0 0.0
  %686 = vmatpush1.msra.mxu0 %v429
  %687 = vmatprep.subr.mxu0 0.0
  %688 = vmatpush1.msra.mxu0 %v430
  %689 = vmatprep.subr.mxu0 0.0
  %690 = vmatpush1.msra.mxu0 %v431
  %691 = vmatprep.subr.mxu0 0.0
  %692 = vmatpush1.msra.mxu0 %v432
  %693 = vmatprep.subr.mxu0 0.0
  %694 = vmatpush1.msra.mxu0 %v433
  %695 = vmatprep.subr.mxu0 0.0
  %696 = vmatpush1.msra.mxu0 %v434
  %697 = vmatprep.subr.mxu0 0.0
  %698 = vmatpush1.msra.mxu0 %v435
  %699 = vmatprep.subr.mxu0 0.0
  %700 = vmatpush1.msra.mxu0 %v436
  %701 = vmatprep.subr.mxu0 0.0
  %702 = vmatpush1.msra.mxu0 0.0
  %703 = vmatprep.subr.mxu0 0.0
  %704 = vmatpush1.msra.mxu0 0.0
  %705 = vmatprep.subr.mxu0 0.0
  %706 = vmatpush1.msra.mxu0 0.0
  %707 = vmatprep.subr.mxu0 0.0
  %708 = vmatpush1.msra.mxu0 0.0
  %709 = vmatprep.subr.mxu0 0.0
  %710 = vmatpush1.msra.mxu0 0.0
  %711 = vmatprep.subr.mxu0 0.0
  %712 = vmatpush1.msra.mxu0 0.0
  %713 = vmatprep.subr.mxu0 0.0
  %714 = vmatpush1.msra.mxu0 0.0
  %715 = vmatprep.subr.mxu0 0.0
  %716 = vmatpush1.msra.mxu0 0.0
  %717 = vmatprep.subr.mxu0 0.0
  %718 = vmatpush1.msra.mxu0 0.0
  %719 = vmatprep.subr.mxu0 0.0
  %720 = vmatpush1.msra.mxu0 0.0
  %721 = vmatprep.subr.mxu0 0.0
  %722 = vmatpush1.msra.mxu0 0.0
  %723 = vmatprep.subr.mxu0 0.0
  %724 = vmatpush1.msra.mxu0 0.0
  %725 = vmatprep.subr.mxu0 0.0
  %726 = vmatpush1.msra.mxu0 0.0
  %727 = vmatprep.subr.mxu0 0.0
  %728 = vmatpush1.msra.mxu0 0.0
  %729 = vmatprep.subr.mxu0 0.0
  %730 = vmatpush1.msra.mxu0 0.0
  %731 = vmatprep.subr.mxu0 0.0
  %732 = vmatpush1.msra.mxu0 0.0
  %733 = vmatprep.mubr.f32.mxu0 0.0
  %734 = vmatmul.mubr.f32.gmra.mrb[0].mxu0 %v668
  %v735 = vpop.f32.mrb[0].mxu0
  %v736 = vadd.f32 0.0, %v735
  %v737 = vpop.f32.mrb[0].mxu0
  %738 = vdwg.mxu0
  %v739 = vmul.f32 %v736, 0.35355338
  %v740 = vlaneseq
  %v741 = vshrl.u32 %v740, 7
  %v742 = vsub.s32 1, %v741
  %v743 = vrot.slane %v587, %v742
  %vm744 = vcmp.eq.s32.totalorder %v743, 1
  %v745 = vsel %vm744, -9e+15, %v739
  %746 = vrot.lane.b32.xlu0 %v373, 64
  %v747 = vpop.permute.xlu0 %746
  %v748 = vsel %vm440, %v747, 0
  %750 = vmatprep.subr.mxu0 0.0
  %751 = vmatpush1.msra.mxu0 %v417
  %752 = vmatprep.subr.mxu0 0.0
  %753 = vmatpush1.msra.mxu0 %v418
  %754 = vmatprep.subr.mxu0 0.0
  %755 = vmatpush1.msra.mxu0 %v419
  %756 = vmatprep.subr.mxu0 0.0
  %757 = vmatpush1.msra.mxu0 %v420
  %758 = vmatprep.subr.mxu0 0.0
  %759 = vmatpush1.msra.mxu0 0.0
  %760 = vmatprep.subr.mxu0 0.0
  %761 = vmatpush1.msra.mxu0 0.0
  %762 = vmatprep.subr.mxu0 0.0
  %763 = vmatpush1.msra.mxu0 0.0
  %764 = vmatprep.subr.mxu0 0.0
  %765 = vmatpush1.msra.mxu0 0.0
  %766 = vmatprep.subr.mxu0 0.0
  %767 = vmatpush1.msra.mxu0 0.0
  %768 = vmatprep.subr.mxu0 0.0
  %769 = vmatpush1.msra.mxu0 0.0
  %770 = vmatprep.subr.mxu0 0.0
  %771 = vmatpush1.msra.mxu0 0.0
  %772 = vmatprep.subr.mxu0 0.0
  %773 = vmatpush1.msra.mxu0 0.0
  %774 = vmatprep.subr.mxu0 0.0
  %775 = vmatpush1.msra.mxu0 0.0
  %776 = vmatprep.subr.mxu0 0.0
  %777 = vmatpush1.msra.mxu0 0.0
  %778 = vmatprep.subr.mxu0 0.0
  %779 = vmatpush1.msra.mxu0 0.0
  %780 = vmatprep.subr.mxu0 0.0
  %781 = vmatpush1.msra.mxu0 0.0
  %782 = vmatprep.subr.mxu0 0.0
  %783 = vmatpush1.msra.mxu0 0.0
  %784 = vmatprep.subr.mxu0 0.0
  %785 = vmatpush1.msra.mxu0 0.0
  %786 = vmatprep.subr.mxu0 0.0
  %787 = vmatpush1.msra.mxu0 0.0
  %788 = vmatprep.subr.mxu0 0.0
  %789 = vmatpush1.msra.mxu0 0.0
  %790 = vmatprep.subr.mxu0 0.0
  %791 = vmatpush1.msra.mxu0 0.0
  %792 = vmatprep.subr.mxu0 0.0
  %793 = vmatpush1.msra.mxu0 0.0
  %794 = vmatprep.subr.mxu0 0.0
  %795 = vmatpush1.msra.mxu0 0.0
  %796 = vmatprep.subr.mxu0 0.0
  %797 = vmatpush1.msra.mxu0 0.0
  %798 = vmatprep.subr.mxu0 0.0
  %799 = vmatpush1.msra.mxu0 0.0
  %800 = vmatprep.subr.mxu0 0.0
  %801 = vmatpush1.msra.mxu0 0.0
  %802 = vmatprep.subr.mxu0 0.0
  %803 = vmatpush1.msra.mxu0 0.0
  %804 = vmatprep.subr.mxu0 0.0
  %805 = vmatpush1.msra.mxu0 0.0
  %806 = vmatprep.subr.mxu0 0.0
  %807 = vmatpush1.msra.mxu0 0.0
  %808 = vmatprep.subr.mxu0 0.0
  %809 = vmatpush1.msra.mxu0 0.0
  %810 = vmatprep.subr.mxu0 0.0
  %811 = vmatpush1.msra.mxu0 0.0
  %812 = vmatprep.subr.mxu0 0.0
  %813 = vmatpush1.msra.mxu0 0.0
  %814 = vmatprep.mubr.f32.mxu0 0.0
  %815 = vmatmul.mubr.f32.gmra.mrb[0].mxu0 %v748
  %v816 = vpop.f32.mrb[0].mxu0
  %v817 = vadd.f32 0.0, %v816
  %v818 = vpop.f32.mrb[0].mxu0
  %819 = vdwg.mxu0
  %v820 = vmul.f32 %v371, %v817
  %821 = vmatprep.subr.mxu0 0.0
  %822 = vmatpush1.msra.mxu0 %v421
  %823 = vmatprep.subr.mxu0 0.0
  %824 = vmatpush1.msra.mxu0 %v422
  %825 = vmatprep.subr.mxu0 0.0
  %826 = vmatpush1.msra.mxu0 %v423
  %827 = vmatprep.subr.mxu0 0.0
  %828 = vmatpush1.msra.mxu0 %v424
  %829 = vmatprep.subr.mxu0 0.0
  %830 = vmatpush1.msra.mxu0 %v425
  %831 = vmatprep.subr.mxu0 0.0
  %832 = vmatpush1.msra.mxu0 %v426
  %833 = vmatprep.subr.mxu0 0.0
  %834 = vmatpush1.msra.mxu0 %v427
  %835 = vmatprep.subr.mxu0 0.0
  %836 = vmatpush1.msra.mxu0 %v428
  %837 = vmatprep.subr.mxu0 0.0
  %838 = vmatpush1.msra.mxu0 %v429
  %839 = vmatprep.subr.mxu0 0.0
  %840 = vmatpush1.msra.mxu0 %v430
  %841 = vmatprep.subr.mxu0 0.0
  %842 = vmatpush1.msra.mxu0 %v431
  %843 = vmatprep.subr.mxu0 0.0
  %844 = vmatpush1.msra.mxu0 %v432
  %845 = vmatprep.subr.mxu0 0.0
  %846 = vmatpush1.msra.mxu0 %v433
  %847 = vmatprep.subr.mxu0 0.0
  %848 = vmatpush1.msra.mxu0 %v434
  %849 = vmatprep.subr.mxu0 0.0
  %850 = vmatpush1.msra.mxu0 %v435
  %851 = vmatprep.subr.mxu0 0.0
  %852 = vmatpush1.msra.mxu0 %v436
  %853 = vmatprep.subr.mxu0 0.0
  %854 = vmatpush1.msra.mxu0 0.0
  %855 = vmatprep.subr.mxu0 0.0
  %856 = vmatpush1.msra.mxu0 0.0
  %857 = vmatprep.subr.mxu0 0.0
  %858 = vmatpush1.msra.mxu0 0.0
  %859 = vmatprep.subr.mxu0 0.0
  %860 = vmatpush1.msra.mxu0 0.0
  %861 = vmatprep.subr.mxu0 0.0
  %862 = vmatpush1.msra.mxu0 0.0
  %863 = vmatprep.subr.mxu0 0.0
  %864 = vmatpush1.msra.mxu0 0.0
  %865 = vmatprep.subr.mxu0 0.0
  %866 = vmatpush1.msra.mxu0 0.0
  %867 = vmatprep.subr.mxu0 0.0
  %868 = vmatpush1.msra.mxu0 0.0
  %869 = vmatprep.subr.mxu0 0.0
  %870 = vmatpush1.msra.mxu0 0.0
  %871 = vmatprep.subr.mxu0 0.0
  %872 = vmatpush1.msra.mxu0 0.0
  %873 = vmatprep.subr.mxu0 0.0
  %874 = vmatpush1.msra.mxu0 0.0
  %875 = vmatprep.subr.mxu0 0.0
  %876 = vmatpush1.msra.mxu0 0.0
  %877 = vmatprep.subr.mxu0 0.0
  %878 = vmatpush1.msra.mxu0 0.0
  %879 = vmatprep.subr.mxu0 0.0
  %880 = vmatpush1.msra.mxu0 0.0
  %881 = vmatprep.subr.mxu0 0.0
  %882 = vmatpush1.msra.mxu0 0.0
  %883 = vmatprep.subr.mxu0 0.0
  %884 = vmatpush1.msra.mxu0 0.0
  %885 = vmatprep.mubr.f32.mxu0 0.0
  %886 = vmatmul.mubr.f32.gmra.mrb[0].mxu0 %v820
  %v887 = vpop.f32.mrb[0].mxu0
  %v888 = vadd.f32 0.0, %v887
  %v889 = vpop.f32.mrb[0].mxu0
  %890 = vdwg.mxu0
  %v891 = vmul.f32 %v888, 0.35355338
  %v892 = vlaneseq
  %v893 = vshrl.u32 %v892, 7
  %v894 = vsub.s32 2, %v893
  %v895 = vrot.slane %v587, %v894
  %vm896 = vcmp.eq.s32.totalorder %v895, 1
  %v897 = vsel %vm896, -9e+15, %v891
  %898 = vrot.lane.b32.xlu0 %v373, 32
  %v899 = vpop.permute.xlu0 %898
  %v900 = vsel %vm440, %v899, 0
  %902 = vmatprep.subr.mxu0 0.0
  %903 = vmatpush1.msra.mxu0 %v417
  %904 = vmatprep.subr.mxu0 0.0
  %905 = vmatpush1.msra.mxu0 %v418
  %906 = vmatprep.subr.mxu0 0.0
  %907 = vmatpush1.msra.mxu0 %v419
  %908 = vmatprep.subr.mxu0 0.0
  %909 = vmatpush1.msra.mxu0 %v420
  %910 = vmatprep.subr.mxu0 0.0
  %911 = vmatpush1.msra.mxu0 0.0
  %912 = vmatprep.subr.mxu0 0.0
  %913 = vmatpush1.msra.mxu0 0.0
  %914 = vmatprep.subr.mxu0 0.0
  %915 = vmatpush1.msra.mxu0 0.0
  %916 = vmatprep.subr.mxu0 0.0
  %917 = vmatpush1.msra.mxu0 0.0
  %918 = vmatprep.subr.mxu0 0.0
  %919 = vmatpush1.msra.mxu0 0.0
  %920 = vmatprep.subr.mxu0 0.0
  %921 = vmatpush1.msra.mxu0 0.0
  %922 = vmatprep.subr.mxu0 0.0
  %923 = vmatpush1.msra.mxu0 0.0
  %924 = vmatprep.subr.mxu0 0.0
  %925 = vmatpush1.msra.mxu0 0.0
  %926 = vmatprep.subr.mxu0 0.0
  %927 = vmatpush1.msra.mxu0 0.0
  %928 = vmatprep.subr.mxu0 0.0
  %929 = vmatpush1.msra.mxu0 0.0
  %930 = vmatprep.subr.mxu0 0.0
  %931 = vmatpush1.msra.mxu0 0.0
  %932 = vmatprep.subr.mxu0 0.0
  %933 = vmatpush1.msra.mxu0 0.0
  %934 = vmatprep.subr.mxu0 0.0
  %935 = vmatpush1.msra.mxu0 0.0
  %936 = vmatprep.subr.mxu0 0.0
  %937 = vmatpush1.msra.mxu0 0.0
  %938 = vmatprep.subr.mxu0 0.0
  %939 = vmatpush1.msra.mxu0 0.0
  %940 = vmatprep.subr.mxu0 0.0
  %941 = vmatpush1.msra.mxu0 0.0
  %942 = vmatprep.subr.mxu0 0.0
  %943 = vmatpush1.msra.mxu0 0.0
  %944 = vmatprep.subr.mxu0 0.0
  %945 = vmatpush1.msra.mxu0 0.0
  %946 = vmatprep.subr.mxu0 0.0
  %947 = vmatpush1.msra.mxu0 0.0
  %948 = vmatprep.subr.mxu0 0.0
  %949 = vmatpush1.msra.mxu0 0.0
  %950 = vmatprep.subr.mxu0 0.0
  %951 = vmatpush1.msra.mxu0 0.0
  %952 = vmatprep.subr.mxu0 0.0
  %953 = vmatpush1.msra.mxu0 0.0
  %954 = vmatprep.subr.mxu0 0.0
  %955 = vmatpush1.msra.mxu0 0.0
  %956 = vmatprep.subr.mxu0 0.0
  %957 = vmatpush1.msra.mxu0 0.0
  %958 = vmatprep.subr.mxu0 0.0
  %959 = vmatpush1.msra.mxu0 0.0
  %960 = vmatprep.subr.mxu0 0.0
  %961 = vmatpush1.msra.mxu0 0.0
  %962 = vmatprep.subr.mxu0 0.0
  %963 = vmatpush1.msra.mxu0 0.0
  %964 = vmatprep.subr.mxu0 0.0
  %965 = vmatpush1.msra.mxu0 0.0
  %966 = vmatprep.mubr.f32.mxu0 0.0
  %967 = vmatmul.mubr.f32.gmra.mrb[0].mxu0 %v900
  %v968 = vpop.f32.mrb[0].mxu0
  %v969 = vadd.f32 0.0, %v968
  %v970 = vpop.f32.mrb[0].mxu0
  %971 = vdwg.mxu0
  %v972 = vmul.f32 %v371, %v969
  %973 = vmatprep.subr.mxu0 0.0
  %974 = vmatpush1.msra.mxu0 %v421
  %975 = vmatprep.subr.mxu0 0.0
  %976 = vmatpush1.msra.mxu0 %v422
  %977 = vmatprep.subr.mxu0 0.0
  %978 = vmatpush1.msra.mxu0 %v423
  %979 = vmatprep.subr.mxu0 0.0
  %980 = vmatpush1.msra.mxu0 %v424
  %981 = vmatprep.subr.mxu0 0.0
  %982 = vmatpush1.msra.mxu0 %v425
  %983 = vmatprep.subr.mxu0 0.0
  %984 = vmatpush1.msra.mxu0 %v426
  %985 = vmatprep.subr.mxu0 0.0
  %986 = vmatpush1.msra.mxu0 %v427
  %987 = vmatprep.subr.mxu0 0.0
  %988 = vmatpush1.msra.mxu0 %v428
  %989 = vmatprep.subr.mxu0 0.0
  %990 = vmatpush1.msra.mxu0 %v429
  %991 = vmatprep.subr.mxu0 0.0
  %992 = vmatpush1.msra.mxu0 %v430
  %993 = vmatprep.subr.mxu0 0.0
  %994 = vmatpush1.msra.mxu0 %v431
  %995 = vmatprep.subr.mxu0 0.0
  %996 = vmatpush1.msra.mxu0 %v432
  %997 = vmatprep.subr.mxu0 0.0
  %998 = vmatpush1.msra.mxu0 %v433
  %999 = vmatprep.subr.mxu0 0.0
  %1000 = vmatpush1.msra.mxu0 %v434
  %1001 = vmatprep.subr.mxu0 0.0
  %1002 = vmatpush1.msra.mxu0 %v435
  %1003 = vmatprep.subr.mxu0 0.0
  %1004 = vmatpush1.msra.mxu0 %v436
  %1005 = vmatprep.subr.mxu0 0.0
  %1006 = vmatpush1.msra.mxu0 0.0
  %1007 = vmatprep.subr.mxu0 0.0
  %1008 = vmatpush1.msra.mxu0 0.0
  %1009 = vmatprep.subr.mxu0 0.0
  %1010 = vmatpush1.msra.mxu0 0.0
  %1011 = vmatprep.subr.mxu0 0.0
  %1012 = vmatpush1.msra.mxu0 0.0
  %1013 = vmatprep.subr.mxu0 0.0
  %1014 = vmatpush1.msra.mxu0 0.0
  %1015 = vmatprep.subr.mxu0 0.0
  %1016 = vmatpush1.msra.mxu0 0.0
  %1017 = vmatprep.subr.mxu0 0.0
  %1018 = vmatpush1.msra.mxu0 0.0
  %1019 = vmatprep.subr.mxu0 0.0
  %1020 = vmatpush1.msra.mxu0 0.0
  %1021 = vmatprep.subr.mxu0 0.0
  %1022 = vmatpush1.msra.mxu0 0.0
  %1023 = vmatprep.subr.mxu0 0.0
  %1024 = vmatpush1.msra.mxu0 0.0
  %1025 = vmatprep.subr.mxu0 0.0
  %1026 = vmatpush1.msra.mxu0 0.0
  %1027 = vmatprep.subr.mxu0 0.0
  %1028 = vmatpush1.msra.mxu0 0.0
  %1029 = vmatprep.subr.mxu0 0.0
  %1030 = vmatpush1.msra.mxu0 0.0
  %1031 = vmatprep.subr.mxu0 0.0
  %1032 = vmatpush1.msra.mxu0 0.0
  %1033 = vmatprep.subr.mxu0 0.0
  %1034 = vmatpush1.msra.mxu0 0.0
  %1035 = vmatprep.subr.mxu0 0.0
  %1036 = vmatpush1.msra.mxu0 0.0
  %1037 = vmatprep.mubr.f32.mxu0 0.0
  %1038 = vmatmul.mubr.f32.gmra.mrb[0].mxu0 %v972
  %v1039 = vpop.f32.mrb[0].mxu0
  %v1040 = vadd.f32 0.0, %v1039
  %v1041 = vpop.f32.mrb[0].mxu0
  %1042 = vdwg.mxu0
  %v1043 = vmul.f32 %v1040, 0.35355338
  %v1044 = vlaneseq
  %v1045 = vshrl.u32 %v1044, 7
  %v1046 = vsub.s32 3, %v1045
  %v1047 = vrot.slane %v587, %v1046
  %vm1048 = vcmp.eq.s32.totalorder %v1047, 1
  %v1049 = vsel %vm1048, -9e+15, %v1043
  %v1050 = vmax.f32 %v593, %v745
  %v1051 = vmax.f32 %v1050, %v897
  %v1052 = vmax.f32 %v1051, %v1049
  %v1053 = vsub.f32 %v593, %v1052
  %v1054 = vmul.f32 %v1053, 1.442695
  %v1055 = vpow.pop %v1054
  %v1056 = vsub.f32 %v745, %v1052
  %v1057 = vmul.f32 %v1056, 1.442695
  %v1058 = vpow.pop %v1057
  %v1059 = vsub.f32 %v897, %v1052
  %v1060 = vmul.f32 %v1059, 1.442695
  %v1061 = vpow.pop %v1060
  %v1062 = vsub.f32 %v1049, %v1052
  %v1063 = vmul.f32 %v1062, 1.442695
  %v1064 = vpow.pop %v1063
  %v1065 = vadd.f32 %v1055, %v1058
  %v1066 = vadd.f32 %v1065, %v1061
  %v1067 = vadd.f32 %v1066, %v1064
  %v1068 = vrcp.pop %v1067
  %v1069 = vmul.f32 1.0, %v1068
  %v1070 = vmul.f32 %v1055, %v1069
  %vm1071 = vcmask 130048
  %v1073 = vsel %vm1071, %v1070, 0
  %1075 = vmatprep.subr.mxu0 0.0
  %1076 = vmatpush1.msra.mxu0 %v437
  %1077 = vmatprep.subr.mxu0 0.0
  %1078 = vmatpush1.msra.mxu0 %v438
  %1079 = vmatprep.subr.mxu0 0.0
  %1080 = vmatpush1.msra.mxu0 0.0
  %1081 = vmatprep.subr.mxu0 0.0
  %1082 = vmatpush1.msra.mxu0 0.0
  %1083 = vmatprep.subr.mxu0 0.0
  %1084 = vmatpush1.msra.mxu0 0.0
  %1085 = vmatprep.subr.mxu0 0.0
  %1086 = vmatpush1.msra.mxu0 0.0
  %1087 = vmatprep.subr.mxu0 0.0
  %1088 = vmatpush1.msra.mxu0 0.0
  %1089 = vmatprep.subr.mxu0 0.0
  %1090 = vmatpush1.msra.mxu0 0.0
  %1091 = vmatprep.subr.mxu0 0.0
  %1092 = vmatpush1.msra.mxu0 0.0
  %1093 = vmatprep.subr.mxu0 0.0
  %1094 = vmatpush1.msra.mxu0 0.0
  %1095 = vmatprep.subr.mxu0 0.0
  %1096 = vmatpush1.msra.mxu0 0.0
  %1097 = vmatprep.subr.mxu0 0.0
  %1098 = vmatpush1.msra.mxu0 0.0
  %1099 = vmatprep.subr.mxu0 0.0
  %1100 = vmatpush1.msra.mxu0 0.0
  %1101 = vmatprep.subr.mxu0 0.0
  %1102 = vmatpush1.msra.mxu0 0.0
  %1103 = vmatprep.subr.mxu0 0.0
  %1104 = vmatpush1.msra.mxu0 0.0
  %1105 = vmatprep.subr.mxu0 0.0
  %1106 = vmatpush1.msra.mxu0 0.0
  %1107 = vmatprep.subr.mxu0 0.0
  %1108 = vmatpush1.msra.mxu0 0.0
  %1109 = vmatprep.subr.mxu0 0.0
  %1110 = vmatpush1.msra.mxu0 0.0
  %1111 = vmatprep.subr.mxu0 0.0
  %1112 = vmatpush1.msra.mxu0 0.0
  %1113 = vmatprep.subr.mxu0 0.0
  %1114 = vmatpush1.msra.mxu0 0.0
  %1115 = vmatprep.subr.mxu0 0.0
  %1116 = vmatpush1.msra.mxu0 0.0
  %1117 = vmatprep.subr.mxu0 0.0
  %1118 = vmatpush1.msra.mxu0 0.0
  %1119 = vmatprep.subr.mxu0 0.0
  %1120 = vmatpush1.msra.mxu0 0.0
  %1121 = vmatprep.subr.mxu0 0.0
  %1122 = vmatpush1.msra.mxu0 0.0
  %1123 = vmatprep.subr.mxu0 0.0
  %1124 = vmatpush1.msra.mxu0 0.0
  %1125 = vmatprep.subr.mxu0 0.0
  %1126 = vmatpush1.msra.mxu0 0.0
  %1127 = vmatprep.subr.mxu0 0.0
  %1128 = vmatpush1.msra.mxu0 0.0
  %1129 = vmatprep.subr.mxu0 0.0
  %1130 = vmatpush1.msra.mxu0 0.0
  %1131 = vmatprep.subr.mxu0 0.0
  %1132 = vmatpush1.msra.mxu0 0.0
  %1133 = vmatprep.subr.mxu0 0.0
  %1134 = vmatpush1.msra.mxu0 0.0
  %1135 = vmatprep.subr.mxu0 0.0
  %1136 = vmatpush1.msra.mxu0 0.0
  %1137 = vmatprep.subr.mxu0 0.0
  %1138 = vmatpush1.msra.mxu0 0.0
  %1139 = vmatprep.mubr.f32.mxu0 0.0
  %1140 = vmatmul.mubr.f32.gmra.mrb[0].mxu0 %v1073
  %v1141 = vpop.f32.mrb[0].mxu0
  %v1142 = vadd.f32 0.0, %v1141
  %v1143 = vpop.f32.mrb[0].mxu0
  %1144 = vdwg.mxu0
  %v1146 = vsel %vm440, %v412, 0
  %1148 = vmatprep.subr.mxu0 0.0
  %1149 = vmatpush1.msra.mxu0 %v417
  %1150 = vmatprep.subr.mxu0 0.0
  %1151 = vmatpush1.msra.mxu0 %v418
  %1152 = vmatprep.subr.mxu0 0.0
  %1153 = vmatpush1.msra.mxu0 %v419
  %1154 = vmatprep.subr.mxu0 0.0
  %1155 = vmatpush1.msra.mxu0 %v420
  %1156 = vmatprep.subr.mxu0 0.0
  %1157 = vmatpush1.msra.mxu0 0.0
  %1158 = vmatprep.subr.mxu0 0.0
  %1159 = vmatpush1.msra.mxu0 0.0
  %1160 = vmatprep.subr.mxu0 0.0
  %1161 = vmatpush1.msra.mxu0 0.0
  %1162 = vmatprep.subr.mxu0 0.0
  %1163 = vmatpush1.msra.mxu0 0.0
  %1164 = vmatprep.subr.mxu0 0.0
  %1165 = vmatpush1.msra.mxu0 0.0
  %1166 = vmatprep.subr.mxu0 0.0
  %1167 = vmatpush1.msra.mxu0 0.0
  %1168 = vmatprep.subr.mxu0 0.0
  %1169 = vmatpush1.msra.mxu0 0.0
  %1170 = vmatprep.subr.mxu0 0.0
  %1171 = vmatpush1.msra.mxu0 0.0
  %1172 = vmatprep.subr.mxu0 0.0
  %1173 = vmatpush1.msra.mxu0 0.0
  %1174 = vmatprep.subr.mxu0 0.0
  %1175 = vmatpush1.msra.mxu0 0.0
  %1176 = vmatprep.subr.mxu0 0.0
  %1177 = vmatpush1.msra.mxu0 0.0
  %1178 = vmatprep.subr.mxu0 0.0
  %1179 = vmatpush1.msra.mxu0 0.0
  %1180 = vmatprep.subr.mxu0 0.0
  %1181 = vmatpush1.msra.mxu0 0.0
  %1182 = vmatprep.subr.mxu0 0.0
  %1183 = vmatpush1.msra.mxu0 0.0
  %1184 = vmatprep.subr.mxu0 0.0
  %1185 = vmatpush1.msra.mxu0 0.0
  %1186 = vmatprep.subr.mxu0 0.0
  %1187 = vmatpush1.msra.mxu0 0.0
  %1188 = vmatprep.subr.mxu0 0.0
  %1189 = vmatpush1.msra.mxu0 0.0
  %1190 = vmatprep.subr.mxu0 0.0
  %1191 = vmatpush1.msra.mxu0 0.0
  %1192 = vmatprep.subr.mxu0 0.0
  %1193 = vmatpush1.msra.mxu0 0.0
  %1194 = vmatprep.subr.mxu0 0.0
  %1195 = vmatpush1.msra.mxu0 0.0
  %1196 = vmatprep.subr.mxu0 0.0
  %1197 = vmatpush1.msra.mxu0 0.0
  %1198 = vmatprep.subr.mxu0 0.0
  %1199 = vmatpush1.msra.mxu0 0.0
  %1200 = vmatprep.subr.mxu0 0.0
  %1201 = vmatpush1.msra.mxu0 0.0
  %1202 = vmatprep.subr.mxu0 0.0
  %1203 = vmatpush1.msra.mxu0 0.0
  %1204 = vmatprep.subr.mxu0 0.0
  %1205 = vmatpush1.msra.mxu0 0.0
  %1206 = vmatprep.subr.mxu0 0.0
  %1207 = vmatpush1.msra.mxu0 0.0
  %1208 = vmatprep.subr.mxu0 0.0
  %1209 = vmatpush1.msra.mxu0 0.0
  %1210 = vmatprep.subr.mxu0 0.0
  %1211 = vmatpush1.msra.mxu0 0.0
  %1212 = vmatprep.mubr.f32.mxu0 0.0
  %1213 = vmatmul.mubr.f32.gmra.mrb[0].mxu0 %v1146
  %v1214 = vpop.f32.mrb[0].mxu0
  %v1215 = vadd.f32 0.0, %v1214
  %v1216 = vpop.f32.mrb[0].mxu0
  %1217 = vdwg.mxu0
  %v1218 = vmul.f32 %v1142, %v1215
  %v1219 = vmul.f32 %v1058, %v1069
  %v1221 = vsel %vm1071, %v1219, 0
  %1223 = vmatprep.subr.mxu0 0.0
  %1224 = vmatpush1.msra.mxu0 %v437
  %1225 = vmatprep.subr.mxu0 0.0
  %1226 = vmatpush1.msra.mxu0 %v438
  %1227 = vmatprep.subr.mxu0 0.0
  %1228 = vmatpush1.msra.mxu0 0.0
  %1229 = vmatprep.subr.mxu0 0.0
  %1230 = vmatpush1.msra.mxu0 0.0
  %1231 = vmatprep.subr.mxu0 0.0
  %1232 = vmatpush1.msra.mxu0 0.0
  %1233 = vmatprep.subr.mxu0 0.0
  %1234 = vmatpush1.msra.mxu0 0.0
  %1235 = vmatprep.subr.mxu0 0.0
  %1236 = vmatpush1.msra.mxu0 0.0
  %1237 = vmatprep.subr.mxu0 0.0
  %1238 = vmatpush1.msra.mxu0 0.0
  %1239 = vmatprep.subr.mxu0 0.0
  %1240 = vmatpush1.msra.mxu0 0.0
  %1241 = vmatprep.subr.mxu0 0.0
  %1242 = vmatpush1.msra.mxu0 0.0
  %1243 = vmatprep.subr.mxu0 0.0
  %1244 = vmatpush1.msra.mxu0 0.0
  %1245 = vmatprep.subr.mxu0 0.0
  %1246 = vmatpush1.msra.mxu0 0.0
  %1247 = vmatprep.subr.mxu0 0.0
  %1248 = vmatpush1.msra.mxu0 0.0
  %1249 = vmatprep.subr.mxu0 0.0
  %1250 = vmatpush1.msra.mxu0 0.0
  %1251 = vmatprep.subr.mxu0 0.0
  %1252 = vmatpush1.msra.mxu0 0.0
  %1253 = vmatprep.subr.mxu0 0.0
  %1254 = vmatpush1.msra.mxu0 0.0
  %1255 = vmatprep.subr.mxu0 0.0
  %1256 = vmatpush1.msra.mxu0 0.0
  %1257 = vmatprep.subr.mxu0 0.0
  %1258 = vmatpush1.msra.mxu0 0.0
  %1259 = vmatprep.subr.mxu0 0.0
  %1260 = vmatpush1.msra.mxu0 0.0
  %1261 = vmatprep.subr.mxu0 0.0
  %1262 = vmatpush1.msra.mxu0 0.0
  %1263 = vmatprep.subr.mxu0 0.0
  %1264 = vmatpush1.msra.mxu0 0.0
  %1265 = vmatprep.subr.mxu0 0.0
  %1266 = vmatpush1.msra.mxu0 0.0
  %1267 = vmatprep.subr.mxu0 0.0
  %1268 = vmatpush1.msra.mxu0 0.0
  %1269 = vmatprep.subr.mxu0 0.0
  %1270 = vmatpush1.msra.mxu0 0.0
  %1271 = vmatprep.subr.mxu0 0.0
  %1272 = vmatpush1.msra.mxu0 0.0
  %1273 = vmatprep.subr.mxu0 0.0
  %1274 = vmatpush1.msra.mxu0 0.0
  %1275 = vmatprep.subr.mxu0 0.0
  %1276 = vmatpush1.msra.mxu0 0.0
  %1277 = vmatprep.subr.mxu0 0.0
  %1278 = vmatpush1.msra.mxu0 0.0
  %1279 = vmatprep.subr.mxu0 0.0
  %1280 = vmatpush1.msra.mxu0 0.0
  %1281 = vmatprep.subr.mxu0 0.0
  %1282 = vmatpush1.msra.mxu0 0.0
  %1283 = vmatprep.subr.mxu0 0.0
  %1284 = vmatpush1.msra.mxu0 0.0
  %1285 = vmatprep.subr.mxu0 0.0
  %1286 = vmatpush1.msra.mxu0 0.0
  %1287 = vmatprep.mubr.f32.mxu0 0.0
  %1288 = vmatmul.mubr.f32.gmra.mrb[0].mxu0 %v1221
  %v1289 = vpop.f32.mrb[0].mxu0
  %v1290 = vadd.f32 0.0, %v1289
  %v1291 = vpop.f32.mrb[0].mxu0
  %1292 = vdwg.mxu0
  %1293 = vrot.lane.b32.xlu0 %v412, 96
  %v1294 = vpop.permute.xlu0 %1293
  %v1295 = vsel %vm440, %v1294, 0
  %1297 = vmatprep.subr.mxu0 0.0
  %1298 = vmatpush1.msra.mxu0 %v417
  %1299 = vmatprep.subr.mxu0 0.0
  %1300 = vmatpush1.msra.mxu0 %v418
  %1301 = vmatprep.subr.mxu0 0.0
  %1302 = vmatpush1.msra.mxu0 %v419
  %1303 = vmatprep.subr.mxu0 0.0
  %1304 = vmatpush1.msra.mxu0 %v420
  %1305 = vmatprep.subr.mxu0 0.0
  %1306 = vmatpush1.msra.mxu0 0.0
  %1307 = vmatprep.subr.mxu0 0.0
  %1308 = vmatpush1.msra.mxu0 0.0
  %1309 = vmatprep.subr.mxu0 0.0
  %1310 = vmatpush1.msra.mxu0 0.0
  %1311 = vmatprep.subr.mxu0 0.0
  %1312 = vmatpush1.msra.mxu0 0.0
  %1313 = vmatprep.subr.mxu0 0.0
  %1314 = vmatpush1.msra.mxu0 0.0
  %1315 = vmatprep.subr.mxu0 0.0
  %1316 = vmatpush1.msra.mxu0 0.0
  %1317 = vmatprep.subr.mxu0 0.0
  %1318 = vmatpush1.msra.mxu0 0.0
  %1319 = vmatprep.subr.mxu0 0.0
  %1320 = vmatpush1.msra.mxu0 0.0
  %1321 = vmatprep.subr.mxu0 0.0
  %1322 = vmatpush1.msra.mxu0 0.0
  %1323 = vmatprep.subr.mxu0 0.0
  %1324 = vmatpush1.msra.mxu0 0.0
  %1325 = vmatprep.subr.mxu0 0.0
  %1326 = vmatpush1.msra.mxu0 0.0
  %1327 = vmatprep.subr.mxu0 0.0
  %1328 = vmatpush1.msra.mxu0 0.0
  %1329 = vmatprep.subr.mxu0 0.0
  %1330 = vmatpush1.msra.mxu0 0.0
  %1331 = vmatprep.subr.mxu0 0.0
  %1332 = vmatpush1.msra.mxu0 0.0
  %1333 = vmatprep.subr.mxu0 0.0
  %1334 = vmatpush1.msra.mxu0 0.0
  %1335 = vmatprep.subr.mxu0 0.0
  %1336 = vmatpush1.msra.mxu0 0.0
  %1337 = vmatprep.subr.mxu0 0.0
  %1338 = vmatpush1.msra.mxu0 0.0
  %1339 = vmatprep.subr.mxu0 0.0
  %1340 = vmatpush1.msra.mxu0 0.0
  %1341 = vmatprep.subr.mxu0 0.0
  %1342 = vmatpush1.msra.mxu0 0.0
  %1343 = vmatprep.subr.mxu0 0.0
  %1344 = vmatpush1.msra.mxu0 0.0
  %1345 = vmatprep.subr.mxu0 0.0
  %1346 = vmatpush1.msra.mxu0 0.0
  %1347 = vmatprep.subr.mxu0 0.0
  %1348 = vmatpush1.msra.mxu0 0.0
  %1349 = vmatprep.subr.mxu0 0.0
  %1350 = vmatpush1.msra.mxu0 0.0
  %1351 = vmatprep.subr.mxu0 0.0
  %1352 = vmatpush1.msra.mxu0 0.0
  %1353 = vmatprep.subr.mxu0 0.0
  %1354 = vmatpush1.msra.mxu0 0.0
  %1355 = vmatprep.subr.mxu0 0.0
  %1356 = vmatpush1.msra.mxu0 0.0
  %1357 = vmatprep.subr.mxu0 0.0
  %1358 = vmatpush1.msra.mxu0 0.0
  %1359 = vmatprep.subr.mxu0 0.0
  %1360 = vmatpush1.msra.mxu0 0.0
  %1361 = vmatprep.mubr.f32.mxu0 0.0
  %1362 = vmatmul.mubr.f32.gmra.mrb[0].mxu0 %v1295
  %v1363 = vpop.f32.mrb[0].mxu0
  %v1364 = vadd.f32 0.0, %v1363
  %v1365 = vpop.f32.mrb[0].mxu0
  %1366 = vdwg.mxu0
  %v1367 = vmul.f32 %v1290, %v1364
  %v1368 = vadd.f32 %v1218, %v1367
  %v1369 = vmul.f32 %v1061, %v1069
  %v1371 = vsel %vm1071, %v1369, 0
  %1373 = vmatprep.subr.mxu0 0.0
  %1374 = vmatpush1.msra.mxu0 %v437
  %1375 = vmatprep.subr.mxu0 0.0
  %1376 = vmatpush1.msra.mxu0 %v438
  %1377 = vmatprep.subr.mxu0 0.0
  %1378 = vmatpush1.msra.mxu0 0.0
  %1379 = vmatprep.subr.mxu0 0.0
  %1380 = vmatpush1.msra.mxu0 0.0
  %1381 = vmatprep.subr.mxu0 0.0
  %1382 = vmatpush1.msra.mxu0 0.0
  %1383 = vmatprep.subr.mxu0 0.0
  %1384 = vmatpush1.msra.mxu0 0.0
  %1385 = vmatprep.subr.mxu0 0.0
  %1386 = vmatpush1.msra.mxu0 0.0
  %1387 = vmatprep.subr.mxu0 0.0
  %1388 = vmatpush1.msra.mxu0 0.0
  %1389 = vmatprep.subr.mxu0 0.0
  %1390 = vmatpush1.msra.mxu0 0.0
  %1391 = vmatprep.subr.mxu0 0.0
  %1392 = vmatpush1.msra.mxu0 0.0
  %1393 = vmatprep.subr.mxu0 0.0
  %1394 = vmatpush1.msra.mxu0 0.0
  %1395 = vmatprep.subr.mxu0 0.0
  %1396 = vmatpush1.msra.mxu0 0.0
  %1397 = vmatprep.subr.mxu0 0.0
  %1398 = vmatpush1.msra.mxu0 0.0
  %1399 = vmatprep.subr.mxu0 0.0
  %1400 = vmatpush1.msra.mxu0 0.0
  %1401 = vmatprep.subr.mxu0 0.0
  %1402 = vmatpush1.msra.mxu0 0.0
  %1403 = vmatprep.subr.mxu0 0.0
  %1404 = vmatpush1.msra.mxu0 0.0
  %1405 = vmatprep.subr.mxu0 0.0
  %1406 = vmatpush1.msra.mxu0 0.0
  %1407 = vmatprep.subr.mxu0 0.0
  %1408 = vmatpush1.msra.mxu0 0.0
  %1409 = vmatprep.subr.mxu0 0.0
  %1410 = vmatpush1.msra.mxu0 0.0
  %1411 = vmatprep.subr.mxu0 0.0
  %1412 = vmatpush1.msra.mxu0 0.0
  %1413 = vmatprep.subr.mxu0 0.0
  %1414 = vmatpush1.msra.mxu0 0.0
  %1415 = vmatprep.subr.mxu0 0.0
  %1416 = vmatpush1.msra.mxu0 0.0
  %1417 = vmatprep.subr.mxu0 0.0
  %1418 = vmatpush1.msra.mxu0 0.0
  %1419 = vmatprep.subr.mxu0 0.0
  %1420 = vmatpush1.msra.mxu0 0.0
  %1421 = vmatprep.subr.mxu0 0.0
  %1422 = vmatpush1.msra.mxu0 0.0
  %1423 = vmatprep.subr.mxu0 0.0
  %1424 = vmatpush1.msra.mxu0 0.0
  %1425 = vmatprep.subr.mxu0 0.0
  %1426 = vmatpush1.msra.mxu0 0.0
  %1427 = vmatprep.subr.mxu0 0.0
  %1428 = vmatpush1.msra.mxu0 0.0
  %1429 = vmatprep.subr.mxu0 0.0
  %1430 = vmatpush1.msra.mxu0 0.0
  %1431 = vmatprep.subr.mxu0 0.0
  %1432 = vmatpush1.msra.mxu0 0.0
  %1433 = vmatprep.subr.mxu0 0.0
  %1434 = vmatpush1.msra.mxu0 0.0
  %1435 = vmatprep.subr.mxu0 0.0
  %1436 = vmatpush1.msra.mxu0 0.0
  %1437 = vmatprep.mubr.f32.mxu0 0.0
  %1438 = vmatmul.mubr.f32.gmra.mrb[0].mxu0 %v1371
  %v1439 = vpop.f32.mrb[0].mxu0
  %v1440 = vadd.f32 0.0, %v1439
  %v1441 = vpop.f32.mrb[0].mxu0
  %1442 = vdwg.mxu0
  %1443 = vrot.lane.b32.xlu0 %v412, 64
  %v1444 = vpop.permute.xlu0 %1443
  %v1445 = vsel %vm440, %v1444, 0
  %1447 = vmatprep.subr.mxu0 0.0
  %1448 = vmatpush1.msra.mxu0 %v417
  %1449 = vmatprep.subr.mxu0 0.0
  %1450 = vmatpush1.msra.mxu0 %v418
  %1451 = vmatprep.subr.mxu0 0.0
  %1452 = vmatpush1.msra.mxu0 %v419
  %1453 = vmatprep.subr.mxu0 0.0
  %1454 = vmatpush1.msra.mxu0 %v420
  %1455 = vmatprep.subr.mxu0 0.0
  %1456 = vmatpush1.msra.mxu0 0.0
  %1457 = vmatprep.subr.mxu0 0.0
  %1458 = vmatpush1.msra.mxu0 0.0
  %1459 = vmatprep.subr.mxu0 0.0
  %1460 = vmatpush1.msra.mxu0 0.0
  %1461 = vmatprep.subr.mxu0 0.0
  %1462 = vmatpush1.msra.mxu0 0.0
  %1463 = vmatprep.subr.mxu0 0.0
  %1464 = vmatpush1.msra.mxu0 0.0
  %1465 = vmatprep.subr.mxu0 0.0
  %1466 = vmatpush1.msra.mxu0 0.0
  %1467 = vmatprep.subr.mxu0 0.0
  %1468 = vmatpush1.msra.mxu0 0.0
  %1469 = vmatprep.subr.mxu0 0.0
  %1470 = vmatpush1.msra.mxu0 0.0
  %1471 = vmatprep.subr.mxu0 0.0
  %1472 = vmatpush1.msra.mxu0 0.0
  %1473 = vmatprep.subr.mxu0 0.0
  %1474 = vmatpush1.msra.mxu0 0.0
  %1475 = vmatprep.subr.mxu0 0.0
  %1476 = vmatpush1.msra.mxu0 0.0
  %1477 = vmatprep.subr.mxu0 0.0
  %1478 = vmatpush1.msra.mxu0 0.0
  %1479 = vmatprep.subr.mxu0 0.0
  %1480 = vmatpush1.msra.mxu0 0.0
  %1481 = vmatprep.subr.mxu0 0.0
  %1482 = vmatpush1.msra.mxu0 0.0
  %1483 = vmatprep.subr.mxu0 0.0
  %1484 = vmatpush1.msra.mxu0 0.0
  %1485 = vmatprep.subr.mxu0 0.0
  %1486 = vmatpush1.msra.mxu0 0.0
  %1487 = vmatprep.subr.mxu0 0.0
  %1488 = vmatpush1.msra.mxu0 0.0
  %1489 = vmatprep.subr.mxu0 0.0
  %1490 = vmatpush1.msra.mxu0 0.0
  %1491 = vmatprep.subr.mxu0 0.0
  %1492 = vmatpush1.msra.mxu0 0.0
  %1493 = vmatprep.subr.mxu0 0.0
  %1494 = vmatpush1.msra.mxu0 0.0
  %1495 = vmatprep.subr.mxu0 0.0
  %1496 = vmatpush1.msra.mxu0 0.0
  %1497 = vmatprep.subr.mxu0 0.0
  %1498 = vmatpush1.msra.mxu0 0.0
  %1499 = vmatprep.subr.mxu0 0.0
  %1500 = vmatpush1.msra.mxu0 0.0
  %1501 = vmatprep.subr.mxu0 0.0
  %1502 = vmatpush1.msra.mxu0 0.0
  %1503 = vmatprep.subr.mxu0 0.0
  %1504 = vmatpush1.msra.mxu0 0.0
  %1505 = vmatprep.subr.mxu0 0.0
  %1506 = vmatpush1.msra.mxu0 0.0
  %1507 = vmatprep.subr.mxu0 0.0
  %1508 = vmatpush1.msra.mxu0 0.0
  %1509 = vmatprep.subr.mxu0 0.0
  %1510 = vmatpush1.msra.mxu0 0.0
  %1511 = vmatprep.mubr.f32.mxu0 0.0
  %1512 = vmatmul.mubr.f32.gmra.mrb[0].mxu0 %v1445
  %v1513 = vpop.f32.mrb[0].mxu0
  %v1514 = vadd.f32 0.0, %v1513
  %v1515 = vpop.f32.mrb[0].mxu0
  %1516 = vdwg.mxu0
  %v1517 = vmul.f32 %v1440, %v1514
  %v1518 = vadd.f32 %v1368, %v1517
  %v1519 = vmul.f32 %v1064, %v1069
  %v1521 = vsel %vm1071, %v1519, 0
  %1523 = vmatprep.subr.mxu0 0.0
  %1524 = vmatpush1.msra.mxu0 %v437
  %1525 = vmatprep.subr.mxu0 0.0
  %1526 = vmatpush1.msra.mxu0 %v438
  %1527 = vmatprep.subr.mxu0 0.0
  %1528 = vmatpush1.msra.mxu0 0.0
  %1529 = vmatprep.subr.mxu0 0.0
  %1530 = vmatpush1.msra.mxu0 0.0
  %1531 = vmatprep.subr.mxu0 0.0
  %1532 = vmatpush1.msra.mxu0 0.0
  %1533 = vmatprep.subr.mxu0 0.0
  %1534 = vmatpush1.msra.mxu0 0.0
  %1535 = vmatprep.subr.mxu0 0.0
  %1536 = vmatpush1.msra.mxu0 0.0
  %1537 = vmatprep.subr.mxu0 0.0
  %1538 = vmatpush1.msra.mxu0 0.0
  %1539 = vmatprep.subr.mxu0 0.0
  %1540 = vmatpush1.msra.mxu0 0.0
  %1541 = vmatprep.subr.mxu0 0.0
  %1542 = vmatpush1.msra.mxu0 0.0
  %1543 = vmatprep.subr.mxu0 0.0
  %1544 = vmatpush1.msra.mxu0 0.0
  %1545 = vmatprep.subr.mxu0 0.0
  %1546 = vmatpush1.msra.mxu0 0.0
  %1547 = vmatprep.subr.mxu0 0.0
  %1548 = vmatpush1.msra.mxu0 0.0
  %1549 = vmatprep.subr.mxu0 0.0
  %1550 = vmatpush1.msra.mxu0 0.0
  %1551 = vmatprep.subr.mxu0 0.0
  %1552 = vmatpush1.msra.mxu0 0.0
  %1553 = vmatprep.subr.mxu0 0.0
  %1554 = vmatpush1.msra.mxu0 0.0
  %1555 = vmatprep.subr.mxu0 0.0
  %1556 = vmatpush1.msra.mxu0 0.0
  %1557 = vmatprep.subr.mxu0 0.0
  %1558 = vmatpush1.msra.mxu0 0.0
  %1559 = vmatprep.subr.mxu0 0.0
  %1560 = vmatpush1.msra.mxu0 0.0
  %1561 = vmatprep.subr.mxu0 0.0
  %1562 = vmatpush1.msra.mxu0 0.0
  %1563 = vmatprep.subr.mxu0 0.0
  %1564 = vmatpush1.msra.mxu0 0.0
  %1565 = vmatprep.subr.mxu0 0.0
  %1566 = vmatpush1.msra.mxu0 0.0
  %1567 = vmatprep.subr.mxu0 0.0
  %1568 = vmatpush1.msra.mxu0 0.0
  %1569 = vmatprep.subr.mxu0 0.0
  %1570 = vmatpush1.msra.mxu0 0.0
  %1571 = vmatprep.subr.mxu0 0.0
  %1572 = vmatpush1.msra.mxu0 0.0
  %1573 = vmatprep.subr.mxu0 0.0
  %1574 = vmatpush1.msra.mxu0 0.0
  %1575 = vmatprep.subr.mxu0 0.0
  %1576 = vmatpush1.msra.mxu0 0.0
  %1577 = vmatprep.subr.mxu0 0.0
  %1578 = vmatpush1.msra.mxu0 0.0
  %1579 = vmatprep.subr.mxu0 0.0
  %1580 = vmatpush1.msra.mxu0 0.0
  %1581 = vmatprep.subr.mxu0 0.0
  %1582 = vmatpush1.msra.mxu0 0.0
  %1583 = vmatprep.subr.mxu0 0.0
  %1584 = vmatpush1.msra.mxu0 0.0
  %1585 = vmatprep.subr.mxu0 0.0
  %1586 = vmatpush1.msra.mxu0 0.0
  %1587 = vmatprep.mubr.f32.mxu0 0.0
  %1588 = vmatmul.mubr.f32.gmra.mrb[0].mxu0 %v1521
  %v1589 = vpop.f32.mrb[0].mxu0
  %v1590 = vadd.f32 0.0, %v1589
  %v1591 = vpop.f32.mrb[0].mxu0
  %1592 = vdwg.mxu0
  %1593 = vrot.lane.b32.xlu0 %v412, 32
  %v1594 = vpop.permute.xlu0 %1593
  %v1595 = vsel %vm440, %v1594, 0
  %1597 = vmatprep.subr.mxu0 0.0
  %1598 = vmatpush1.msra.mxu0 %v417
  %1599 = vmatprep.subr.mxu0 0.0
  %1600 = vmatpush1.msra.mxu0 %v418
  %1601 = vmatprep.subr.mxu0 0.0
  %1602 = vmatpush1.msra.mxu0 %v419
  %1603 = vmatprep.subr.mxu0 0.0
  %1604 = vmatpush1.msra.mxu0 %v420
  %1605 = vmatprep.subr.mxu0 0.0
  %1606 = vmatpush1.msra.mxu0 0.0
  %1607 = vmatprep.subr.mxu0 0.0
  %1608 = vmatpush1.msra.mxu0 0.0
  %1609 = vmatprep.subr.mxu0 0.0
  %1610 = vmatpush1.msra.mxu0 0.0
  %1611 = vmatprep.subr.mxu0 0.0
  %1612 = vmatpush1.msra.mxu0 0.0
  %1613 = vmatprep.subr.mxu0 0.0
  %1614 = vmatpush1.msra.mxu0 0.0
  %1615 = vmatprep.subr.mxu0 0.0
  %1616 = vmatpush1.msra.mxu0 0.0
  %1617 = vmatprep.subr.mxu0 0.0
  %1618 = vmatpush1.msra.mxu0 0.0
  %1619 = vmatprep.subr.mxu0 0.0
  %1620 = vmatpush1.msra.mxu0 0.0
  %1621 = vmatprep.subr.mxu0 0.0
  %1622 = vmatpush1.msra.mxu0 0.0
  %1623 = vmatprep.subr.mxu0 0.0
  %1624 = vmatpush1.msra.mxu0 0.0
  %1625 = vmatprep.subr.mxu0 0.0
  %1626 = vmatpush1.msra.mxu0 0.0
  %1627 = vmatprep.subr.mxu0 0.0
  %1628 = vmatpush1.msra.mxu0 0.0
  %1629 = vmatprep.subr.mxu0 0.0
  %1630 = vmatpush1.msra.mxu0 0.0
  %1631 = vmatprep.subr.mxu0 0.0
  %1632 = vmatpush1.msra.mxu0 0.0
  %1633 = vmatprep.subr.mxu0 0.0
  %1634 = vmatpush1.msra.mxu0 0.0
  %1635 = vmatprep.subr.mxu0 0.0
  %1636 = vmatpush1.msra.mxu0 0.0
  %1637 = vmatprep.subr.mxu0 0.0
  %1638 = vmatpush1.msra.mxu0 0.0
  %1639 = vmatprep.subr.mxu0 0.0
  %1640 = vmatpush1.msra.mxu0 0.0
  %1641 = vmatprep.subr.mxu0 0.0
  %1642 = vmatpush1.msra.mxu0 0.0
  %1643 = vmatprep.subr.mxu0 0.0
  %1644 = vmatpush1.msra.mxu0 0.0
  %1645 = vmatprep.subr.mxu0 0.0
  %1646 = vmatpush1.msra.mxu0 0.0
  %1647 = vmatprep.subr.mxu0 0.0
  %1648 = vmatpush1.msra.mxu0 0.0
  %1649 = vmatprep.subr.mxu0 0.0
  %1650 = vmatpush1.msra.mxu0 0.0
  %1651 = vmatprep.subr.mxu0 0.0
  %1652 = vmatpush1.msra.mxu0 0.0
  %1653 = vmatprep.subr.mxu0 0.0
  %1654 = vmatpush1.msra.mxu0 0.0
  %1655 = vmatprep.subr.mxu0 0.0
  %1656 = vmatpush1.msra.mxu0 0.0
  %1657 = vmatprep.subr.mxu0 0.0
  %1658 = vmatpush1.msra.mxu0 0.0
  %1659 = vmatprep.subr.mxu0 0.0
  %1660 = vmatpush1.msra.mxu0 0.0
  %1661 = vmatprep.mubr.f32.mxu0 0.0
  %1662 = vmatmul.mubr.f32.gmra.mrb[0].mxu0 %v1595
  %v1663 = vpop.f32.mrb[0].mxu0
  %v1664 = vadd.f32 0.0, %v1663
  %v1665 = vpop.f32.mrb[0].mxu0
  %1666 = vdwg.mxu0
  %v1667 = vmul.f32 %v1590, %v1664
  %v1668 = vadd.f32 %v1518, %v1667
  %v1669 = vpack.c.bf16 %v1668, %v1668
  %v1670 = vld [vmem:[%s5] sm:$0xf]
  %v1671 = vld [vmem:[%s5 + $0x4] sm:$0xf]
  %v1672 = vld [vmem:[%s5 + $0x8] sm:$0xf]
  %v1673 = vld [vmem:[%s5 + $0xc] sm:$0xf]
  %v1674 = vld [vmem:[%s5 + $0x10] sm:$0xf]
  %v1675 = vld [vmem:[%s5 + $0x14] sm:$0xf]
  %v1676 = vld [vmem:[%s5 + $0x18] sm:$0xf]
  %v1677 = vld [vmem:[%s5 + $0x1c] sm:$0xf]
  %v1678 = vld [vmem:[%s5 + $0x20] sm:$0xf]
  %v1679 = vld [vmem:[%s5 + $0x24] sm:$0xf]
  %v1680 = vld [vmem:[%s5 + $0x28] sm:$0xf]
  %v1681 = vld [vmem:[%s5 + $0x2c] sm:$0xf]
  %v1682 = vld [vmem:[%s5 + $0x30] sm:$0xf]
  %v1683 = vld [vmem:[%s5 + $0x34] sm:$0xf]
  %v1684 = vld [vmem:[%s5 + $0x38] sm:$0xf]
  %v1685 = vld [vmem:[%s5 + $0x3c] sm:$0xf]
  %v1686 = vld [vmem:[%s6] sm:$0x1]
  %v1688 = vlaneseq
  %v1689 = vshrl.u32 %v1688, 7
  %v1690 = vsub.s32 0, %v1689
  %v1691 = vrot.slane %v1686, %v1690
  %v1709 = vunpack.c.l.b16 %v1670
  %v1710 = vunpack.c.l.b16 %v1671
  %v1711 = vunpack.c.l.b16 %v1672
  %v1712 = vunpack.c.l.b16 %v1673
  %v1713 = vunpack.c.l.b16 %v1674
  %v1714 = vunpack.c.l.b16 %v1675
  %v1715 = vunpack.c.l.b16 %v1676
  %v1716 = vunpack.c.l.b16 %v1677
  %v1717 = vunpack.c.l.b16 %v1678
  %v1718 = vunpack.c.l.b16 %v1679
  %v1719 = vunpack.c.l.b16 %v1680
  %v1720 = vunpack.c.l.b16 %v1681
  %v1721 = vunpack.c.l.b16 %v1682
  %v1722 = vunpack.c.l.b16 %v1683
  %v1723 = vunpack.c.l.b16 %v1684
  %v1724 = vunpack.c.l.b16 %v1685
  %v1725 = vpack.c.b16 %v1710, %v1709
  %v1726 = vpack.c.b16 %v1712, %v1711
  %v1727 = vpack.c.b16 %v1714, %v1713
  %v1728 = vpack.c.b16 %v1716, %v1715
  %v1729 = vpack.c.b16 %v1718, %v1717
  %v1730 = vpack.c.b16 %v1720, %v1719
  %v1731 = vpack.c.b16 %v1722, %v1721
  %v1732 = vpack.c.b16 %v1724, %v1723
  %1741 = vmatprep.subr.bf16.mxu0 0
  %1742 = vmatpush1.bf16.msra.mxu0 %v1725
  %1743 = vmatprep.subr.bf16.mxu0 0
  %1744 = vmatpush1.bf16.msra.mxu0 %v1726
  %1745 = vmatprep.subr.bf16.mxu0 0
  %1746 = vmatpush1.bf16.msra.mxu0 %v1727
  %1747 = vmatprep.subr.bf16.mxu0 0
  %1748 = vmatpush1.bf16.msra.mxu0 %v1728
  %1749 = vmatprep.subr.bf16.mxu0 0
  %1750 = vmatpush1.bf16.msra.mxu0 %v1729
  %1751 = vmatprep.subr.bf16.mxu0 0
  %1752 = vmatpush1.bf16.msra.mxu0 %v1730
  %1753 = vmatprep.subr.bf16.mxu0 0
  %1754 = vmatpush1.bf16.msra.mxu0 %v1731
  %1755 = vmatprep.subr.bf16.mxu0 0
  %1756 = vmatpush1.bf16.msra.mxu0 %v1732
  %1757 = vmatprep.subr.bf16.mxu0 0
  %1758 = vmatpush1.bf16.msra.mxu0 0
  %1759 = vmatprep.subr.bf16.mxu0 0
  %1760 = vmatpush1.bf16.msra.mxu0 0
  %1761 = vmatprep.subr.bf16.mxu0 0
  %1762 = vmatpush1.bf16.msra.mxu0 0
  %1763 = vmatprep.subr.bf16.mxu0 0
  %1764 = vmatpush1.bf16.msra.mxu0 0
  %1765 = vmatprep.subr.bf16.mxu0 0
  %1766 = vmatpush1.bf16.msra.mxu0 0
  %1767 = vmatprep.subr.bf16.mxu0 0
  %1768 = vmatpush1.bf16.msra.mxu0 0
  %1769 = vmatprep.subr.bf16.mxu0 0
  %1770 = vmatpush1.bf16.msra.mxu0 0
  %1771 = vmatprep.subr.bf16.mxu0 0
  %1772 = vmatpush1.bf16.msra.mxu0 0
  %1773 = vmatprep.mubr.bf16.mxu0 0
  %1774 = vmatmul.mubr.bf16.gmra.mrb[0].mxu0 %v1669
  %v1775 = vpop.f32.mrb[0].mxu0
  %v1776 = vadd.f32 %v1691, %v1775
  %v1777 = vpop.f32.mrb[0].mxu0
  %v1778 = vpop.f32.mrb[0].mxu0
  %v1779 = vpop.f32.mrb[0].mxu0
  %1780 = vdwg.mxu0
  %v1781 = vadd.f32 %v153, %v1776
  %v1782 = vpack.c.bf16 %v1781, %v1781
  %v1783 = vld [vmem:[%s7] sm:$0xf]
  %v1784 = vld [vmem:[%s7 + $0x4] sm:$0xf]
  %v1785 = vld [vmem:[%s7 + $0x8] sm:$0xf]
  %v1786 = vld [vmem:[%s7 + $0xc] sm:$0xf]
  %v1787 = vld [vmem:[%s7 + $0x10] sm:$0xf]
  %v1788 = vld [vmem:[%s7 + $0x14] sm:$0xf]
  %v1789 = vld [vmem:[%s7 + $0x18] sm:$0xf]
  %v1790 = vld [vmem:[%s7 + $0x1c] sm:$0xf]
  %v1791 = vld [vmem:[%s7 + $0x20] sm:$0xf]
  %v1792 = vld [vmem:[%s7 + $0x24] sm:$0xf]
  %v1793 = vld [vmem:[%s7 + $0x28] sm:$0xf]
  %v1794 = vld [vmem:[%s7 + $0x2c] sm:$0xf]
  %v1795 = vld [vmem:[%s7 + $0x30] sm:$0xf]
  %v1796 = vld [vmem:[%s7 + $0x34] sm:$0xf]
  %v1797 = vld [vmem:[%s7 + $0x38] sm:$0xf]
  %v1798 = vld [vmem:[%s7 + $0x3c] sm:$0xf]
  %v1799 = vld [vmem:[%s8] sm:$0x1]
  %v1801 = vlaneseq
  %v1802 = vshrl.u32 %v1801, 7
  %v1803 = vsub.s32 0, %v1802
  %v1804 = vrot.slane %v1799, %v1803
  %v1822 = vunpack.c.l.b16 %v1783
  %v1823 = vunpack.c.l.b16 %v1784
  %v1824 = vunpack.c.l.b16 %v1785
  %v1825 = vunpack.c.l.b16 %v1786
  %v1826 = vunpack.c.l.b16 %v1787
  %v1827 = vunpack.c.l.b16 %v1788
  %v1828 = vunpack.c.l.b16 %v1789
  %v1829 = vunpack.c.l.b16 %v1790
  %v1830 = vunpack.c.l.b16 %v1791
  %v1831 = vunpack.c.l.b16 %v1792
  %v1832 = vunpack.c.l.b16 %v1793
  %v1833 = vunpack.c.l.b16 %v1794
  %v1834 = vunpack.c.l.b16 %v1795
  %v1835 = vunpack.c.l.b16 %v1796
  %v1836 = vunpack.c.l.b16 %v1797
  %v1837 = vunpack.c.l.b16 %v1798
  %v1838 = vpack.c.b16 %v1823, %v1822
  %v1839 = vpack.c.b16 %v1825, %v1824
  %v1840 = vpack.c.b16 %v1827, %v1826
  %v1841 = vpack.c.b16 %v1829, %v1828
  %v1842 = vpack.c.b16 %v1831, %v1830
  %v1843 = vpack.c.b16 %v1833, %v1832
  %v1844 = vpack.c.b16 %v1835, %v1834
  %v1845 = vpack.c.b16 %v1837, %v1836
  %1854 = vmatprep.subr.bf16.mxu0 0
  %1855 = vmatpush1.bf16.msra.mxu0 %v1838
  %1856 = vmatprep.subr.bf16.mxu0 0
  %1857 = vmatpush1.bf16.msra.mxu0 %v1839
  %1858 = vmatprep.subr.bf16.mxu0 0
  %1859 = vmatpush1.bf16.msra.mxu0 %v1840
  %1860 = vmatprep.subr.bf16.mxu0 0
  %1861 = vmatpush1.bf16.msra.mxu0 %v1841
  %1862 = vmatprep.subr.bf16.mxu0 0
  %1863 = vmatpush1.bf16.msra.mxu0 %v1842
  %1864 = vmatprep.subr.bf16.mxu0 0
  %1865 = vmatpush1.bf16.msra.mxu0 %v1843
  %1866 = vmatprep.subr.bf16.mxu0 0
  %1867 = vmatpush1.bf16.msra.mxu0 %v1844
  %1868 = vmatprep.subr.bf16.mxu0 0
  %1869 = vmatpush1.bf16.msra.mxu0 %v1845
  %1870 = vmatprep.subr.bf16.mxu0 0
  %1871 = vmatpush1.bf16.msra.mxu0 0
  %1872 = vmatprep.subr.bf16.mxu0 0
  %1873 = vmatpush1.bf16.msra.mxu0 0
  %1874 = vmatprep.subr.bf16.mxu0 0
  %1875 = vmatpush1.bf16.msra.mxu0 0
  %1876 = vmatprep.subr.bf16.mxu0 0
  %1877 = vmatpush1.bf16.msra.mxu0 0
  %1878 = vmatprep.subr.bf16.mxu0 0
  %1879 = vmatpush1.bf16.msra.mxu0 0
  %1880 = vmatprep.subr.bf16.mxu0 0
  %1881 = vmatpush1.bf16.msra.mxu0 0
  %1882 = vmatprep.subr.bf16.mxu0 0
  %1883 = vmatpush1.bf16.msra.mxu0 0
  %1884 = vmatprep.subr.bf16.mxu0 0
  %1885 = vmatpush1.bf16.msra.mxu0 0
  %1886 = vmatprep.mubr.bf16.mxu0 0
  %1887 = vmatmul.mubr.bf16.gmra.mrb[0].mxu0 %v1782
  %v1888 = vpop.f32.mrb[0].mxu0
  %v1889 = vadd.f32 %v1804, %v1888
  %v1890 = vpop.f32.mrb[0].mxu0
  %v1891 = vpop.f32.mrb[0].mxu0
  %v1892 = vpop.f32.mrb[0].mxu0
  %1893 = vdwg.mxu0
  %1894 = vst [vmem:[%s13] sm:$0xff] %v1889
  // Predicated region
  $region54: #{a_call__.1} parent=0 // pred_check
    _
  $region55: #{a_call__.1} parent=0 // pred_check_branch
    %1896 = sbr.rel (0) target = $region57
  $region56: #{a_call__.1} parent=0 // pred_region
    _
  $region57: #{a_call__.1} parent=0 // pred_fallthru
    _
  // Predicated region
  $region58: #{a_call__.1} parent=0 // pred_check
    _
  $region59: #{a_call__.1} parent=0 // pred_check_branch
    %1898 = sbr.rel (0) target = $region61
  $region60: #{a_call__.1} parent=0 // pred_region
    _
  $region61: #{a_call__.1} parent=0 // pred_fallthru
    _

</llo_original>
